<compile_context>
chip_gen: v7x
topology: tpu7x:2x2x1
jax: 0.10.0
libtpu: 0.0.40
codegen_flags: <defaults>
</compile_context>

<pallas_src>
import jax
import jax.numpy as jnp
from jax.experimental import pallas as pl
from jax.experimental.pallas import tpu as pltpu

# ----------------------------- config (small) -------------------------------
VOCAB = 50
WORD_DIM = 32          # embedding dim == Conv1d in_channels
REVIEW_LEN = 16        # review_length (sequence length L)
KERNEL_COUNT = 16      # Conv1d out_channels
KERNEL_SIZE = 3
PAD = (KERNEL_SIZE - 1) // 2
CNN_OUT_DIM = 8
ID_EMBD = 8
FM_K = 10
USER_NUM = 10
ITEM_NUM = 12
BATCH = 4
FM_P = CNN_OUT_DIM * 2 + ID_EMBD * 2


# --------------------------- fused Pallas kernel -----------------------------
def deepconn_kernel(rids_ref, uiids_ref, wemb_ref, idemb_ref,
                    convw_ref, convb_ref, linw_ref, linb_ref,
                    vlat_ref, vid_ref, vsqlat_ref, vsqid_ref, fmlb_ref,
                    out_ref):
    """Whole DeepCoNN forward for one batch, everything VMEM-resident.

    rids_ref : (2*B*L, 1) int32 word ids, user review rows then item review rows
    uiids_ref: (2*B, 1)  int32 ids, [uid ; iid + USER_NUM]
    wemb_ref : (VOCAB, D)
    idemb_ref: (USER_NUM+ITEM_NUM, 2E) block-diagonal id-embedding table
    convw_ref: (KS, D, 2C) user|item conv weights stacked along out-channels
    convb_ref: (1, 2C)
    linw_ref : (2C, 2O) block-diagonal merged tower Linear weight; linb_ref (1, 2O)
    vlat_ref : (2O, K+1) = [fm_v[:2O] | fm_lw[:2O]];  vid_ref: (2E, K+1)
    vsqlat_ref/vsqid_ref: matching row blocks of fm_v**2;  fmlb_ref: (1, 1)
    out_ref  : (B, 1) prediction
    """
    B, L, D = BATCH, REVIEW_LEN, WORD_DIM
    KS, C, O, E, K = KERNEL_SIZE, KERNEL_COUNT, CNN_OUT_DIM, ID_EMBD, FM_K
    R = 2 * B * L             # user + item tokens
    CC = 2 * C                # combined conv out-channels

    def onehot(idx, n):
        # idx: (rows, 1) int32 -> (rows, n) f32 one-hot (gather as MXU matmul).
        # TODO(synk): at production vocab/batch sizes, switch to an HBM-resident
        # table (memory_space=pl.ANY) + DMA/pl.Element gather instead of one-hot.
        iota = jax.lax.broadcasted_iota(jnp.int32, (idx.shape[0], n), 1)
        return jnp.where(idx == iota, 1.0, 0.0)

    # ---- word-embedding lookup for both reviews: one one-hot matmul --------
    emb = jnp.dot(onehot(rids_ref[...], VOCAB), wemb_ref[...],
                  preferred_element_type=jnp.float32)                 # (R, D)

    # ---- Conv1d('same') for both towers: roll + mask + per-tap MXU accum ---
    # Token position within its review: masks the implicit zero padding and
    # prevents rolled rows from leaking across sample / tower boundaries.
    t = jax.lax.broadcasted_iota(jnp.int32, (R, 1), 0) % L
    acc = None
    for k in range(KS):
        off = k - PAD                               # row offset of this tap
        if off == 0:
            sh = emb
        else:
            # sh[r] = emb[(r + off) mod R]; wrapped / cross-review rows are the
            # exact rows the 'same' padding zeroes, handled by the mask below.
            sh = pltpu.roll(emb, shift=(-off) % R, axis=0)
            if off < 0:
                sh = jnp.where(t >= -off, sh, 0.0)
            else:
                sh = jnp.where(t < L - off, sh, 0.0)
        d = jnp.dot(sh, convw_ref[k], preferred_element_type=jnp.float32)
        acc = d if acc is None else acc + d
    conv = jnp.maximum(acc + convb_ref[...], 0.0)                     # (R, 2C)

    # ---- MaxPool2d((1, L)) over the review length ---------------------------
    # TODO(synk): if lower_as_mlir shows this reshape materializes a relayout
    # copy, replace with a log2(L) pltpu.roll/maximum tree over the (R, CC) conv.
    pooled = jnp.max(conv.reshape(2 * B, L, CC), axis=1)              # (2B, 2C)

    # ---- merged tower Linear + ReLU (block-diagonal weight, one matmul) -----
    lat = jnp.maximum(
        jnp.dot(pooled, linw_ref[...], preferred_element_type=jnp.float32)
        + linb_ref[...], 0.0)                                         # (2B, 2O)
    # Zero the cross-tower garbage block of each row, then fold user rows and
    # item rows together: x_lat[b] = [u_lat[b] | i_lat[b]].
    rr = jax.lax.broadcasted_iota(jnp.int32, (2 * B, 2 * O), 0)
    cc = jax.lax.broadcasted_iota(jnp.int32, (2 * B, 2 * O), 1)
    lat = jnp.where((rr < B) == (cc < O), lat, 0.0)
    x_lat = lat[:B, :] + lat[B:, :]                                   # (B, 2O)
    # TODO(synk): Dropout layers are identity here (inference / eval mode).

    # ---- id embeddings: one one-hot matmul against block-diagonal table -----
    id_out = jnp.dot(onehot(uiids_ref[...], USER_NUM + ITEM_NUM), idemb_ref[...],
                     preferred_element_type=jnp.float32)              # (2B, 2E)
    x_id = id_out[:B, :] + id_out[B:, :]                              # (B, 2E)

    # ---- FactorizationMachine (linear term fused into the t1 matmul) --------
    t1lin = (jnp.dot(x_lat, vlat_ref[...], preferred_element_type=jnp.float32)
             + jnp.dot(x_id, vid_ref[...], preferred_element_type=jnp.float32))
    lin = t1lin[:, K:] + fmlb_ref[...]                                # (B, 1)
    t1 = t1lin[:, :K] ** 2                                            # (B, K)
    t2 = (jnp.dot(x_lat * x_lat, vsqlat_ref[...], preferred_element_type=jnp.float32)
          + jnp.dot(x_id * x_id, vsqid_ref[...], preferred_element_type=jnp.float32))
    pair = jnp.sum(t1 - t2, axis=1, keepdims=True)                    # (B, 1)
    # Single tiny output store; latents never leave VMEM.  (Lane-dense output
    # packing only matters once many forwards are amortized per call.)
    out_ref[...] = lin + 0.5 * pair


# ------------------------------ wrapper --------------------------------------
def deepconn_forward(kparams, user_review, item_review, uid, iid):
    B, L = user_review.shape
    # Pure layout plumbing (no compute) on the wrapper side: concat user/item
    # ids here so the kernel never does a sublane concat.
    rids = jnp.concatenate([user_review, item_review], axis=0)
    rids = rids.reshape(2 * B * L, 1).astype(jnp.int32)
    uiids = jnp.concatenate([uid, iid + USER_NUM], axis=0)
    uiids = uiids.reshape(2 * B, 1).astype(jnp.int32)

    args = (rids, uiids,
            kparams["word_emb"], kparams["id_emb"],
            kparams["conv_w"], kparams["conv_b"],
            kparams["lin_w"], kparams["lin_b"],
            kparams["fm_v_lat"], kparams["fm_v_id"],
            kparams["fm_vsq_lat"], kparams["fm_vsq_id"], kparams["fm_lb"])

    # grid=() : launch/latency-bound toy sizes, everything fits in VMEM.
    # TODO(synk): for large batches add a batch grid axis with
    # dimension_semantics=("parallel",) to use both v7x TensorCores.
    pred = pl.pallas_call(
        deepconn_kernel,
        out_shape=jax.ShapeDtypeStruct((B, 1), jnp.float32),
        in_specs=[pl.BlockSpec(memory_space=pltpu.MemorySpace.VMEM)] * len(args),
        out_specs=pl.BlockSpec(memory_space=pltpu.MemorySpace.VMEM),
    )(*args)
    # torch.sum(prediction, dim=1).float() on a (B, 1) tensor == squeeze to (B,)
    return pred[:, 0].astype(jnp.float32)


# --------------------------- parameter init ----------------------------------
def init_params(key):
    ks = jax.random.split(key, 8)

    def cnn_params(k):
        k1, k2, k3, k4 = jax.random.split(k, 4)
        return {
            # conv weight in tap-major layout; w[k, d, c] == torch Conv1d W[c, d, k]
            "conv_w": jax.random.normal(
                k1, (KERNEL_SIZE, WORD_DIM, KERNEL_COUNT), jnp.float32) * 0.1,
            "conv_b": jax.random.normal(k2, (1, KERNEL_COUNT), jnp.float32) * 0.1,
            "lin_w": jax.random.normal(
                k3, (KERNEL_COUNT, CNN_OUT_DIM), jnp.float32) * 0.1,
            "lin_b": jax.random.normal(k4, (1, CNN_OUT_DIM), jnp.float32) * 0.1,
        }

    return {
        "word_emb": jax.random.normal(ks[0], (VOCAB, WORD_DIM), jnp.float32) * 0.1,
        "user_emb": jax.random.normal(ks[1], (USER_NUM, ID_EMBD), jnp.float32) * 0.1,
        "item_emb": jax.random.normal(ks[2], (ITEM_NUM, ID_EMBD), jnp.float32) * 0.1,
        "cnn_u": cnn_params(ks[3]),
        "cnn_i": cnn_params(ks[4]),
        "fm_v": jax.random.uniform(ks[5], (FM_P, FM_K), jnp.float32) / 10.0,
        "fm_lw": jax.random.normal(ks[6], (FM_P, 1), jnp.float32) * 0.1,
        "fm_lb": jax.random.normal(ks[7], (1, 1), jnp.float32) * 0.1,
    }


def pack_params(raw):
    """Build kernel-ready layouts ONCE (all constants folded outside the fwd)."""
    C, O, E = KERNEL_COUNT, CNN_OUT_DIM, ID_EMBD
    # user|item conv weights stacked along out-channels: (KS, D, 2C)
    conv_w = jnp.concatenate([raw["cnn_u"]["conv_w"], raw["cnn_i"]["conv_w"]], axis=2)
    conv_b = jnp.concatenate([raw["cnn_u"]["conv_b"], raw["cnn_i"]["conv_b"]], axis=1)
    # block-diagonal merged tower Linear: (2C, 2O)
    lin_w = jnp.zeros((2 * C, 2 * O), jnp.float32)
    lin_w = lin_w.at[:C, :O].set(raw["cnn_u"]["lin_w"]).at[C:, O:].set(raw["cnn_i"]["lin_w"])
    lin_b = jnp.concatenate([raw["cnn_u"]["lin_b"], raw["cnn_i"]["lin_b"]], axis=1)
    # block-diagonal id-embedding table: (USER_NUM+ITEM_NUM, 2E)
    id_emb = jnp.zeros((USER_NUM + ITEM_NUM, 2 * E), jnp.float32)
    id_emb = id_emb.at[:USER_NUM, :E].set(raw["user_emb"])
    id_emb = id_emb.at[USER_NUM:, E:].set(raw["item_emb"])
    # FM params split into row blocks matching [x_lat | x_id]; linear fused as
    # the last column of the t1 RHS; v*v derived here (never drifts from v).
    v, lw = raw["fm_v"], raw["fm_lw"]
    split = 2 * O
    return {
        "word_emb": raw["word_emb"],
        "id_emb": id_emb,
        "conv_w": conv_w, "conv_b": conv_b,
        "lin_w": lin_w, "lin_b": lin_b,
        "fm_v_lat": jnp.concatenate([v[:split], lw[:split]], axis=1),   # (2O, K+1)
        "fm_v_id": jnp.concatenate([v[split:], lw[split:]], axis=1),    # (2E, K+1)
        "fm_vsq_lat": v[:split] ** 2,
        "fm_vsq_id": v[split:] ** 2,
        "fm_lb": raw["fm_lb"],
    }


# ------------------------- pure-JAX reference --------------------------------
def reference_forward(raw, user_review, item_review, uid, iid):
    L, KS = REVIEW_LEN, KERNEL_SIZE

    def tower(ids, p):
        x = raw["word_emb"][ids]                                      # (B, L, D)
        xp = jnp.pad(x, ((0, 0), (PAD, PAD), (0, 0)))
        conv = sum(jnp.einsum("bld,dc->blc", xp[:, k:k + L, :], p["conv_w"][k])
                   for k in range(KS)) + p["conv_b"]
        conv = jnp.maximum(conv, 0.0)
        pooled = jnp.max(conv, axis=1)                                # (B, C)
        return jnp.maximum(pooled @ p["lin_w"] + p["lin_b"], 0.0)

    u_lat = tower(user_review, raw["cnn_u"])
    i_lat = tower(item_review, raw["cnn_i"])
    u_id = raw["user_emb"][uid]
    i_id = raw["item_emb"][iid]
    x = jnp.concatenate([u_lat, i_lat, u_id, i_id], axis=1)
    lin = x @ raw["fm_lw"] + raw["fm_lb"]
    t1 = (x @ raw["fm_v"]) ** 2
    t2 = (x * x) @ (raw["fm_v"] ** 2)
    pred = lin + 0.5 * jnp.sum(t1 - t2, axis=1, keepdims=True)
    return jnp.sum(pred, axis=1).astype(jnp.float32)


# --------------------------------- main --------------------------------------
if __name__ == "__main__":
    key = jax.random.PRNGKey(0)
    kp, k1, k2, k3, k4 = jax.random.split(key, 5)

    raw = init_params(kp)
    kparams = pack_params(raw)

    user_review = jax.random.randint(k1, (BATCH, REVIEW_LEN), 0, VOCAB, jnp.int32)
    item_review = jax.random.randint(k2, (BATCH, REVIEW_LEN), 0, VOCAB, jnp.int32)
    uid = jax.random.randint(k3, (BATCH,), 0, USER_NUM, jnp.int32)
    iid = jax.random.randint(k4, (BATCH,), 0, ITEM_NUM, jnp.int32)

    fwd = jax.jit(deepconn_forward)
    pred = fwd(kparams, user_review, item_review, uid, iid)
    jax.block_until_ready(pred)

    ref = reference_forward(raw, user_review, item_review, uid, iid)
    assert pred.shape == (BATCH,) and pred.dtype == jnp.float32
    # DEFAULT matmul precision (bf16-class MXU passes) on both sides; use
    # precision=HIGHEST everywhere if tighter f32 parity with PyTorch is needed.
    assert jnp.allclose(pred, ref, rtol=2e-2, atol=2e-2), (pred, ref)
    print("KERNEL_OK")
</pallas_src>

<mosaic_0001>
module attributes {stable_mosaic.version = 11 : i64} {
  func.func @deepconn_kernel(%arg0: memref<128x1xi32, #tpu.memory_space<vmem>>, %arg1: memref<8x1xi32, #tpu.memory_space<vmem>>, %arg2: memref<50x32xf32, #tpu.memory_space<vmem>>, %arg3: memref<22x16xf32, #tpu.memory_space<vmem>>, %arg4: memref<3x32x32xf32, #tpu.memory_space<vmem>>, %arg5: memref<1x32xf32, #tpu.memory_space<vmem>>, %arg6: memref<32x16xf32, #tpu.memory_space<vmem>>, %arg7: memref<1x16xf32, #tpu.memory_space<vmem>>, %arg8: memref<16x11xf32, #tpu.memory_space<vmem>>, %arg9: memref<16x11xf32, #tpu.memory_space<vmem>>, %arg10: memref<16x10xf32, #tpu.memory_space<vmem>>, %arg11: memref<16x10xf32, #tpu.memory_space<vmem>>, %arg12: memref<1x1xf32, #tpu.memory_space<vmem>>, %arg13: memref<4x1xf32, #tpu.memory_space<vmem>>) attributes {dimension_semantics = [], scalar_prefetch = 0 : i64, scratch_operands = 0 : i64, tpu.core_type = #tpu.core_type<tc>} {
    %c0 = arith.constant 0 : index
    %c0_0 = arith.constant 0 : index
    %0 = vector.load %arg0[%c0, %c0_0] : memref<128x1xi32, #tpu.memory_space<vmem>>, vector<128x1xi32>
    %1 = tpu.iota {dimensions = array<i32: 1>} : vector<128x50xi32>
    %2 = vector.broadcast %0 : vector<128x1xi32> to vector<128x50xi32>
    %3 = arith.cmpi eq, %2, %1 : vector<128x50xi32>
    %cst = arith.constant 1.000000e+00 : f32
    %cst_1 = arith.constant 0.000000e+00 : f32
    %4 = vector.broadcast %cst : f32 to vector<128x50xf32>
    %5 = vector.broadcast %cst_1 : f32 to vector<128x50xf32>
    %6 = arith.select %3, %4, %5 : vector<128x50xi1>, vector<128x50xf32>
    %c0_2 = arith.constant 0 : index
    %c0_3 = arith.constant 0 : index
    %7 = vector.load %arg2[%c0_2, %c0_3] : memref<50x32xf32, #tpu.memory_space<vmem>>, vector<50x32xf32>
    %cst_4 = arith.constant dense<0.000000e+00> : vector<128x32xf32>
    %8 = tpu.matmul %6, %7, %cst_4 {dimension_numbers = #tpu.dot_dimension_numbers<[1], [0], [0], [1], [0, 0, 1, 1], [], []>} : vector<128x50xf32>, vector<50x32xf32>, vector<128x32xf32> -> vector<128x32xf32>
    %9 = tpu.iota {dimensions = array<i32: 0>} : vector<128x1xi32>
    %c16_i32 = arith.constant 16 : i32
    %c0_i32 = arith.constant 0 : i32
    %10 = arith.cmpi eq, %c16_i32, %c0_i32 : i32
    %c1_i32 = arith.constant 1 : i32
    %11 = arith.select %10, %c1_i32, %c16_i32 : i32
    %12 = vector.broadcast %11 : i32 to vector<128x1xi32>
    %13 = arith.remsi %9, %12 : vector<128x1xi32>
    %c0_i32_5 = arith.constant 0 : i32
    %14 = vector.broadcast %c0_i32_5 : i32 to vector<128x1xi32>
    %15 = arith.cmpi ne, %13, %14 : vector<128x1xi32>
    %c0_i32_6 = arith.constant 0 : i32
    %16 = vector.broadcast %c0_i32_6 : i32 to vector<128x1xi32>
    %17 = arith.cmpi slt, %13, %16 : vector<128x1xi32>
    %c0_i32_7 = arith.constant 0 : i32
    %18 = arith.cmpi slt, %11, %c0_i32_7 : i32
    %19 = vector.broadcast %18 : i1 to vector<128x1xi1>
    %20 = vector.broadcast %19 : vector<128x1xi1> to vector<128x1xi1>
    %21 = arith.xori %17, %20 : vector<128x1xi1>
    %22 = arith.andi %21, %15 : vector<128x1xi1>
    %23 = vector.broadcast %11 : i32 to vector<128x1xi32>
    %24 = arith.addi %13, %23 : vector<128x1xi32>
    %25 = arith.select %22, %24, %13 : vector<128x1xi1>, vector<128x1xi32>
    %c1_i32_8 = arith.constant 1 : i32
    %26 = tpu.dynamic_rotate %8 by %c1_i32_8 dim 0 : vector<128x32xf32>, i32 -> vector<128x32xf32>
    %c1_i32_9 = arith.constant 1 : i32
    %27 = vector.broadcast %c1_i32_9 : i32 to vector<128x1xi32>
    %28 = arith.cmpi sge, %25, %27 : vector<128x1xi32>
    %cst_10 = arith.constant 0.000000e+00 : f32
    %29 = vector.shape_cast %28 : vector<128x1xi1> to vector<128x1xi1>
    %30 = vector.broadcast %29 : vector<128x1xi1> to vector<128x32xi1>
    %31 = vector.broadcast %cst_10 : f32 to vector<128x32xf32>
    %32 = arith.select %30, %26, %31 : vector<128x32xi1>, vector<128x32xf32>
    %c0_11 = arith.constant 0 : index
    %c0_12 = arith.constant 0 : index
    %c0_13 = arith.constant 0 : index
    %33 = vector.load %arg4[%c0_11, %c0_12, %c0_13] : memref<3x32x32xf32, #tpu.memory_space<vmem>>, vector<1x32x32xf32>
    %34 = vector.shape_cast %33 : vector<1x32x32xf32> to vector<32x32xf32>
    %cst_14 = arith.constant dense<0.000000e+00> : vector<128x32xf32>
    %35 = tpu.matmul %32, %34, %cst_14 {dimension_numbers = #tpu.dot_dimension_numbers<[1], [0], [0], [1], [0, 0, 1, 1], [], []>} : vector<128x32xf32>, vector<32x32xf32>, vector<128x32xf32> -> vector<128x32xf32>
    %c1 = arith.constant 1 : index
    %c0_15 = arith.constant 0 : index
    %c0_16 = arith.constant 0 : index
    %36 = vector.load %arg4[%c1, %c0_15, %c0_16] : memref<3x32x32xf32, #tpu.memory_space<vmem>>, vector<1x32x32xf32>
    %37 = vector.shape_cast %36 : vector<1x32x32xf32> to vector<32x32xf32>
    %cst_17 = arith.constant dense<0.000000e+00> : vector<128x32xf32>
    %38 = tpu.matmul %8, %37, %cst_17 {dimension_numbers = #tpu.dot_dimension_numbers<[1], [0], [0], [1], [0, 0, 1, 1], [], []>} : vector<128x32xf32>, vector<32x32xf32>, vector<128x32xf32> -> vector<128x32xf32>
    %39 = arith.addf %35, %38 : vector<128x32xf32>
    %c127_i32 = arith.constant 127 : i32
    %40 = tpu.dynamic_rotate %8 by %c127_i32 dim 0 : vector<128x32xf32>, i32 -> vector<128x32xf32>
    %c15_i32 = arith.constant 15 : i32
    %41 = vector.broadcast %c15_i32 : i32 to vector<128x1xi32>
    %42 = arith.cmpi slt, %25, %41 : vector<128x1xi32>
    %cst_18 = arith.constant 0.000000e+00 : f32
    %43 = vector.shape_cast %42 : vector<128x1xi1> to vector<128x1xi1>
    %44 = vector.broadcast %43 : vector<128x1xi1> to vector<128x32xi1>
    %45 = vector.broadcast %cst_18 : f32 to vector<128x32xf32>
    %46 = arith.select %44, %40, %45 : vector<128x32xi1>, vector<128x32xf32>
    %c2 = arith.constant 2 : index
    %c0_19 = arith.constant 0 : index
    %c0_20 = arith.constant 0 : index
    %47 = vector.load %arg4[%c2, %c0_19, %c0_20] : memref<3x32x32xf32, #tpu.memory_space<vmem>>, vector<1x32x32xf32>
    %48 = vector.shape_cast %47 : vector<1x32x32xf32> to vector<32x32xf32>
    %cst_21 = arith.constant dense<0.000000e+00> : vector<128x32xf32>
    %49 = tpu.matmul %46, %48, %cst_21 {dimension_numbers = #tpu.dot_dimension_numbers<[1], [0], [0], [1], [0, 0, 1, 1], [], []>} : vector<128x32xf32>, vector<32x32xf32>, vector<128x32xf32> -> vector<128x32xf32>
    %50 = arith.addf %39, %49 : vector<128x32xf32>
    %c0_22 = arith.constant 0 : index
    %c0_23 = arith.constant 0 : index
    %51 = vector.load %arg5[%c0_22, %c0_23] : memref<1x32xf32, #tpu.memory_space<vmem>>, vector<1x32xf32>
    %52 = vector.broadcast %51 : vector<1x32xf32> to vector<128x32xf32>
    %53 = arith.addf %50, %52 : vector<128x32xf32>
    %cst_24 = arith.constant 0.000000e+00 : f32
    %54 = vector.broadcast %cst_24 : f32 to vector<128x32xf32>
    %55 = arith.maximumf %53, %54 : vector<128x32xf32>
    %56 = vector.shape_cast %55 : vector<128x32xf32> to vector<8x16x32xf32>
    %cst_25 = arith.constant dense<0xFF800000> : vector<8x32xf32>
    %57 = vector.multi_reduction <maximumf>, %56, %cst_25 [1] : vector<8x16x32xf32> to vector<8x32xf32>
    %c0_26 = arith.constant 0 : index
    %c0_27 = arith.constant 0 : index
    %58 = vector.load %arg6[%c0_26, %c0_27] : memref<32x16xf32, #tpu.memory_space<vmem>>, vector<32x16xf32>
    %cst_28 = arith.constant dense<0.000000e+00> : vector<8x16xf32>
    %59 = tpu.matmul %57, %58, %cst_28 {dimension_numbers = #tpu.dot_dimension_numbers<[1], [0], [0], [1], [0, 0, 1, 1], [], []>} : vector<8x32xf32>, vector<32x16xf32>, vector<8x16xf32> -> vector<8x16xf32>
    %c0_29 = arith.constant 0 : index
    %c0_30 = arith.constant 0 : index
    %60 = vector.load %arg7[%c0_29, %c0_30] : memref<1x16xf32, #tpu.memory_space<vmem>>, vector<1x16xf32>
    %61 = vector.broadcast %60 : vector<1x16xf32> to vector<8x16xf32>
    %62 = arith.addf %59, %61 : vector<8x16xf32>
    %cst_31 = arith.constant 0.000000e+00 : f32
    %63 = vector.broadcast %cst_31 : f32 to vector<8x16xf32>
    %64 = arith.maximumf %62, %63 : vector<8x16xf32>
    %65 = tpu.iota {dimensions = array<i32: 0>} : vector<8x16xi32>
    %66 = tpu.iota {dimensions = array<i32: 1>} : vector<8x16xi32>
    %c4_i32 = arith.constant 4 : i32
    %67 = vector.broadcast %c4_i32 : i32 to vector<8x16xi32>
    %68 = arith.cmpi slt, %65, %67 : vector<8x16xi32>
    %c8_i32 = arith.constant 8 : i32
    %69 = vector.broadcast %c8_i32 : i32 to vector<8x16xi32>
    %70 = arith.cmpi slt, %66, %69 : vector<8x16xi32>
    %71 = arith.xori %68, %70 : vector<8x16xi1>
    %cst_32 = arith.constant dense<true> : vector<8x16xi1>
    %72 = arith.xori %71, %cst_32 : vector<8x16xi1>
    %cst_33 = arith.constant 0.000000e+00 : f32
    %73 = vector.broadcast %cst_33 : f32 to vector<8x16xf32>
    %74 = arith.select %72, %64, %73 : vector<8x16xi1>, vector<8x16xf32>
    %75 = vector.extract_strided_slice %74 {offsets = [0, 0], sizes = [4, 16], strides = [1, 1]} : vector<8x16xf32> to vector<4x16xf32>
    %76 = vector.extract_strided_slice %74 {offsets = [4, 0], sizes = [4, 16], strides = [1, 1]} : vector<8x16xf32> to vector<4x16xf32>
    %77 = arith.addf %75, %76 : vector<4x16xf32>
    %c0_34 = arith.constant 0 : index
    %c0_35 = arith.constant 0 : index
    %78 = vector.load %arg1[%c0_34, %c0_35] : memref<8x1xi32, #tpu.memory_space<vmem>>, vector<8x1xi32>
    %79 = tpu.iota {dimensions = array<i32: 1>} : vector<8x22xi32>
    %80 = vector.broadcast %78 : vector<8x1xi32> to vector<8x22xi32>
    %81 = arith.cmpi eq, %80, %79 : vector<8x22xi32>
    %cst_36 = arith.constant 1.000000e+00 : f32
    %cst_37 = arith.constant 0.000000e+00 : f32
    %82 = vector.broadcast %cst_36 : f32 to vector<8x22xf32>
    %83 = vector.broadcast %cst_37 : f32 to vector<8x22xf32>
    %84 = arith.select %81, %82, %83 : vector<8x22xi1>, vector<8x22xf32>
    %c0_38 = arith.constant 0 : index
    %c0_39 = arith.constant 0 : index
    %85 = vector.load %arg3[%c0_38, %c0_39] : memref<22x16xf32, #tpu.memory_space<vmem>>, vector<22x16xf32>
    %cst_40 = arith.constant dense<0.000000e+00> : vector<8x16xf32>
    %86 = tpu.matmul %84, %85, %cst_40 {dimension_numbers = #tpu.dot_dimension_numbers<[1], [0], [0], [1], [0, 0, 1, 1], [], []>} : vector<8x22xf32>, vector<22x16xf32>, vector<8x16xf32> -> vector<8x16xf32>
    %87 = vector.extract_strided_slice %86 {offsets = [0, 0], sizes = [4, 16], strides = [1, 1]} : vector<8x16xf32> to vector<4x16xf32>
    %88 = vector.extract_strided_slice %86 {offsets = [4, 0], sizes = [4, 16], strides = [1, 1]} : vector<8x16xf32> to vector<4x16xf32>
    %89 = arith.addf %87, %88 : vector<4x16xf32>
    %c0_41 = arith.constant 0 : index
    %c0_42 = arith.constant 0 : index
    %90 = vector.load %arg8[%c0_41, %c0_42] : memref<16x11xf32, #tpu.memory_space<vmem>>, vector<16x11xf32>
    %cst_43 = arith.constant dense<0.000000e+00> : vector<4x11xf32>
    %91 = tpu.matmul %77, %90, %cst_43 {dimension_numbers = #tpu.dot_dimension_numbers<[1], [0], [0], [1], [0, 0, 1, 1], [], []>} : vector<4x16xf32>, vector<16x11xf32>, vector<4x11xf32> -> vector<4x11xf32>
    %c0_44 = arith.constant 0 : index
    %c0_45 = arith.constant 0 : index
    %92 = vector.load %arg9[%c0_44, %c0_45] : memref<16x11xf32, #tpu.memory_space<vmem>>, vector<16x11xf32>
    %cst_46 = arith.constant dense<0.000000e+00> : vector<4x11xf32>
    %93 = tpu.matmul %89, %92, %cst_46 {dimension_numbers = #tpu.dot_dimension_numbers<[1], [0], [0], [1], [0, 0, 1, 1], [], []>} : vector<4x16xf32>, vector<16x11xf32>, vector<4x11xf32> -> vector<4x11xf32>
    %94 = arith.addf %91, %93 : vector<4x11xf32>
    %95 = vector.extract_strided_slice %94 {offsets = [0, 10], sizes = [4, 1], strides = [1, 1]} : vector<4x11xf32> to vector<4x1xf32>
    %c0_47 = arith.constant 0 : index
    %c0_48 = arith.constant 0 : index
    %96 = vector.load %arg12[%c0_47, %c0_48] : memref<1x1xf32, #tpu.memory_space<vmem>>, vector<1x1xf32>
    %97 = vector.broadcast %96 : vector<1x1xf32> to vector<4x1xf32>
    %98 = arith.addf %95, %97 : vector<4x1xf32>
    %99 = vector.extract_strided_slice %94 {offsets = [0, 0], sizes = [4, 10], strides = [1, 1]} : vector<4x11xf32> to vector<4x10xf32>
    %100 = arith.mulf %99, %99 : vector<4x10xf32>
    %101 = arith.mulf %77, %77 : vector<4x16xf32>
    %c0_49 = arith.constant 0 : index
    %c0_50 = arith.constant 0 : index
    %102 = vector.load %arg10[%c0_49, %c0_50] : memref<16x10xf32, #tpu.memory_space<vmem>>, vector<16x10xf32>
    %cst_51 = arith.constant dense<0.000000e+00> : vector<4x10xf32>
    %103 = tpu.matmul %101, %102, %cst_51 {dimension_numbers = #tpu.dot_dimension_numbers<[1], [0], [0], [1], [0, 0, 1, 1], [], []>} : vector<4x16xf32>, vector<16x10xf32>, vector<4x10xf32> -> vector<4x10xf32>
    %104 = arith.mulf %89, %89 : vector<4x16xf32>
    %c0_52 = arith.constant 0 : index
    %c0_53 = arith.constant 0 : index
    %105 = vector.load %arg11[%c0_52, %c0_53] : memref<16x10xf32, #tpu.memory_space<vmem>>, vector<16x10xf32>
    %cst_54 = arith.constant dense<0.000000e+00> : vector<4x10xf32>
    %106 = tpu.matmul %104, %105, %cst_54 {dimension_numbers = #tpu.dot_dimension_numbers<[1], [0], [0], [1], [0, 0, 1, 1], [], []>} : vector<4x16xf32>, vector<16x10xf32>, vector<4x10xf32> -> vector<4x10xf32>
    %107 = arith.addf %103, %106 : vector<4x10xf32>
    %108 = arith.subf %100, %107 : vector<4x10xf32>
    %cst_55 = arith.constant dense<0.000000e+00> : vector<4xf32>
    %109 = vector.multi_reduction <add>, %108, %cst_55 [1] : vector<4x10xf32> to vector<4xf32>
    %110 = vector.shape_cast %109 : vector<4xf32> to vector<4x1xf32>
    %cst_56 = arith.constant 5.000000e-01 : f32
    %111 = vector.broadcast %cst_56 : f32 to vector<4x1xf32>
    %112 = arith.mulf %111, %110 : vector<4x1xf32>
    %113 = arith.addf %98, %112 : vector<4x1xf32>
    %c0_57 = arith.constant 0 : index
    %c0_58 = arith.constant 0 : index
    %114 = vector.load %arg13[%c0_57, %c0_58] : memref<4x1xf32, #tpu.memory_space<vmem>>, vector<4x1xf32>
    tpu.vector_store %arg13[%c0_57, %c0_58], %113 {strides = array<i32>} : memref<4x1xf32, #tpu.memory_space<vmem>>, vector<4x1xf32>,
    return
  }
}

</mosaic_0001>

<llo_original>
// kernel: deepconn_forward.1
$region0: #{deepconn_forward.1}
  #allocation0 [shape = 'u32[]', space=smem, size = 0x4, offset = 0x4, fixed_abs, tag = 'smem constant byte address 0x4 - core index']
  #allocation1 [shape = 'u32[144,128]{1,0:T(1,128)}', space=vmem, size = 0x12000, scoped, tag = 'internal scratch']
  #allocation2 [shape = 'f32[1,1]{1,0:T(1,128)S(1)}', space=vmem, size = 0x200, scoped, tag = 'scoped memory for deepconn_forward.1']
  %s0 = inlined_call_operand.vmem [shape: s32[128,1], index: 0, kind: input, shape index: {}]
  %s1 = inlined_call_operand.vmem [shape: s32[8,1], index: 1, kind: input, shape index: {}]
  %s2 = inlined_call_operand.vmem [shape: f32[50,32], index: 2, kind: input, shape index: {}]
  %s3 = inlined_call_operand.vmem [shape: f32[22,16], index: 3, kind: input, shape index: {}]
  %s4 = inlined_call_operand.vmem [shape: f32[3,32,32], index: 4, kind: input, shape index: {}]
  %s5 = inlined_call_operand.vmem [shape: f32[1,32], index: 5, kind: input, shape index: {}]
  %s6 = inlined_call_operand.vmem [shape: f32[32,16], index: 6, kind: input, shape index: {}]
  %s7 = inlined_call_operand.vmem [shape: f32[1,16], index: 7, kind: input, shape index: {}]
  %s8 = inlined_call_operand.vmem [shape: f32[16,11], index: 8, kind: input, shape index: {}]
  %s9 = inlined_call_operand.vmem [shape: f32[16,11], index: 9, kind: input, shape index: {}]
  %s10 = inlined_call_operand.vmem [shape: f32[16,10], index: 10, kind: input, shape index: {}]
  %s11 = inlined_call_operand.vmem [shape: f32[16,10], index: 11, kind: input, shape index: {}]
  %s12 = inlined_call_operand.<no memory space> [shape: f32[1,1], index: 12, kind: input, shape index: {}]
  %s13 = inlined_call_operand.vmem [shape: f32[4,1], index: 13, kind: output, shape index: {}]
  %s14 = sld [smem:[#allocation0]]
  $region62: #{deepconn_forward.1} parent=0
    _
  %s16 = ssub.s32 1, %s14
  %s17 = scalar_select 0, %s16, %s14
  %v18 = vstv %s12
  %19 = vst [vmem:[#allocation2] sm:$0x1] %v18
  // Predicated region
  $region2: #{deepconn_forward.1} parent=0 // pred_check
    _
  $region3: #{deepconn_forward.1} parent=0 // pred_check_branch
    %21 = sbr.rel (0) target = $region5
  $region4: #{deepconn_forward.1} parent=0 // pred_region
    _
  $region5: #{deepconn_forward.1} parent=0 // pred_fallthru
    _
  // Predicated region
  $region6: #{deepconn_forward.1} parent=0 // pred_check
    _
  $region7: #{deepconn_forward.1} parent=0 // pred_check_branch
    %23 = sbr.rel (0) target = $region9
  $region8: #{deepconn_forward.1} parent=0 // pred_region
    _
  $region9: #{deepconn_forward.1} parent=0 // pred_fallthru
    _
  // Predicated region
  $region10: #{deepconn_forward.1} parent=0 // pred_check
    _
  $region11: #{deepconn_forward.1} parent=0 // pred_check_branch
    %25 = sbr.rel (0) target = $region13
  $region12: #{deepconn_forward.1} parent=0 // pred_region
    _
  $region13: #{deepconn_forward.1} parent=0 // pred_fallthru
    _
  // Predicated region
  $region14: #{deepconn_forward.1} parent=0 // pred_check
    _
  $region15: #{deepconn_forward.1} parent=0 // pred_check_branch
    %27 = sbr.rel (0) target = $region17
  $region16: #{deepconn_forward.1} parent=0 // pred_region
    _
  $region17: #{deepconn_forward.1} parent=0 // pred_fallthru
    _
  // Predicated region
  $region18: #{deepconn_forward.1} parent=0 // pred_check
    _
  $region19: #{deepconn_forward.1} parent=0 // pred_check_branch
    %29 = sbr.rel (0) target = $region21
  $region20: #{deepconn_forward.1} parent=0 // pred_region
    _
  $region21: #{deepconn_forward.1} parent=0 // pred_fallthru
    _
  // Predicated region
  $region22: #{deepconn_forward.1} parent=0 // pred_check
    _
  $region23: #{deepconn_forward.1} parent=0 // pred_check_branch
    %31 = sbr.rel (0) target = $region25
  $region24: #{deepconn_forward.1} parent=0 // pred_region
    _
  $region25: #{deepconn_forward.1} parent=0 // pred_fallthru
    _
  // Predicated region
  $region26: #{deepconn_forward.1} parent=0 // pred_check
    _
  $region27: #{deepconn_forward.1} parent=0 // pred_check_branch
    %33 = sbr.rel (0) target = $region29
  $region28: #{deepconn_forward.1} parent=0 // pred_region
    _
  $region29: #{deepconn_forward.1} parent=0 // pred_fallthru
    _
  // Predicated region
  $region30: #{deepconn_forward.1} parent=0 // pred_check
    _
  $region31: #{deepconn_forward.1} parent=0 // pred_check_branch
    %35 = sbr.rel (0) target = $region33
  $region32: #{deepconn_forward.1} parent=0 // pred_region
    _
  $region33: #{deepconn_forward.1} parent=0 // pred_fallthru
    _
  // Predicated region
  $region34: #{deepconn_forward.1} parent=0 // pred_check
    _
  $region35: #{deepconn_forward.1} parent=0 // pred_check_branch
    %37 = sbr.rel (0) target = $region37
  $region36: #{deepconn_forward.1} parent=0 // pred_region
    _
  $region37: #{deepconn_forward.1} parent=0 // pred_fallthru
    _
  // Predicated region
  $region38: #{deepconn_forward.1} parent=0 // pred_check
    _
  $region39: #{deepconn_forward.1} parent=0 // pred_check_branch
    %39 = sbr.rel (0) target = $region41
  $region40: #{deepconn_forward.1} parent=0 // pred_region
    _
  $region41: #{deepconn_forward.1} parent=0 // pred_fallthru
    _
  // Predicated region
  $region42: #{deepconn_forward.1} parent=0 // pred_check
    _
  $region43: #{deepconn_forward.1} parent=0 // pred_check_branch
    %41 = sbr.rel (0) target = $region45
  $region44: #{deepconn_forward.1} parent=0 // pred_region
    _
  $region45: #{deepconn_forward.1} parent=0 // pred_fallthru
    _
  // Predicated region
  $region46: #{deepconn_forward.1} parent=0 // pred_check
    _
  $region47: #{deepconn_forward.1} parent=0 // pred_check_branch
    %43 = sbr.rel (0) target = $region49
  $region48: #{deepconn_forward.1} parent=0 // pred_region
    _
  $region49: #{deepconn_forward.1} parent=0 // pred_fallthru
    _
  // Predicated region
  $region50: #{deepconn_forward.1} parent=0 // pred_check
    _
  $region51: #{deepconn_forward.1} parent=0 // pred_check_branch
    %45 = sbr.rel (0) target = $region53
  $region52: #{deepconn_forward.1} parent=0 // pred_region
    _
  $region53: #{deepconn_forward.1} parent=0 // pred_fallthru
    _
  %v46 = vld [vmem:[%s0] sm:$0xff]
  %v47 = vld [vmem:[%s0 + $0x8] sm:$0xff]
  %v48 = vld [vmem:[%s0 + $0x10] sm:$0xff]
  %v49 = vld [vmem:[%s0 + $0x18] sm:$0xff]
  %v50 = vld [vmem:[%s0 + $0x20] sm:$0xff]
  %v51 = vld [vmem:[%s0 + $0x28] sm:$0xff]
  %v52 = vld [vmem:[%s0 + $0x30] sm:$0xff]
  %v53 = vld [vmem:[%s0 + $0x38] sm:$0xff]
  %v54 = vld [vmem:[%s0 + $0x40] sm:$0xff]
  %v55 = vld [vmem:[%s0 + $0x48] sm:$0xff]
  %v56 = vld [vmem:[%s0 + $0x50] sm:$0xff]
  %v57 = vld [vmem:[%s0 + $0x58] sm:$0xff]
  %v58 = vld [vmem:[%s0 + $0x60] sm:$0xff]
  %v59 = vld [vmem:[%s0 + $0x68] sm:$0xff]
  %v60 = vld [vmem:[%s0 + $0x70] sm:$0xff]
  %v61 = vld [vmem:[%s0 + $0x78] sm:$0xff]
  %v62 = vlaneseq
  %v63 = vand.u32 %v62, 127
  %64 = vset.pattern.permute.xlu0 0
  %65 = vperm.xlu0 %64, %v46
  %v66 = vpop.permute.xlu0 %65
  %67 = vset.pattern.permute.xlu0 0
  %68 = vperm.xlu0 %67, %v47
  %v69 = vpop.permute.xlu0 %68
  %70 = vset.pattern.permute.xlu0 0
  %71 = vperm.xlu0 %70, %v48
  %v72 = vpop.permute.xlu0 %71
  %73 = vset.pattern.permute.xlu0 0
  %74 = vperm.xlu0 %73, %v49
  %v75 = vpop.permute.xlu0 %74
  %76 = vset.pattern.permute.xlu0 0
  %77 = vperm.xlu0 %76, %v50
  %v78 = vpop.permute.xlu0 %77
  %79 = vset.pattern.permute.xlu0 0
  %80 = vperm.xlu0 %79, %v51
  %v81 = vpop.permute.xlu0 %80
  %82 = vset.pattern.permute.xlu0 0
  %83 = vperm.xlu0 %82, %v52
  %v84 = vpop.permute.xlu0 %83
  %85 = vset.pattern.permute.xlu0 0
  %86 = vperm.xlu0 %85, %v53
  %v87 = vpop.permute.xlu0 %86
  %88 = vset.pattern.permute.xlu0 0
  %89 = vperm.xlu0 %88, %v54
  %v90 = vpop.permute.xlu0 %89
  %91 = vset.pattern.permute.xlu0 0
  %92 = vperm.xlu0 %91, %v55
  %v93 = vpop.permute.xlu0 %92
  %94 = vset.pattern.permute.xlu0 0
  %95 = vperm.xlu0 %94, %v56
  %v96 = vpop.permute.xlu0 %95
  %97 = vset.pattern.permute.xlu0 0
  %98 = vperm.xlu0 %97, %v57
  %v99 = vpop.permute.xlu0 %98
  %100 = vset.pattern.permute.xlu0 0
  %101 = vperm.xlu0 %100, %v58
  %v102 = vpop.permute.xlu0 %101
  %103 = vset.pattern.permute.xlu0 0
  %104 = vperm.xlu0 %103, %v59
  %v105 = vpop.permute.xlu0 %104
  %106 = vset.pattern.permute.xlu0 0
  %107 = vperm.xlu0 %106, %v60
  %v108 = vpop.permute.xlu0 %107
  %109 = vset.pattern.permute.xlu0 0
  %110 = vperm.xlu0 %109, %v61
  %v111 = vpop.permute.xlu0 %110
  %vm112 = vcmp.eq.s32.totalorder %v66, %v63
  %vm113 = vcmp.eq.s32.totalorder %v69, %v63
  %vm114 = vcmp.eq.s32.totalorder %v72, %v63
  %vm115 = vcmp.eq.s32.totalorder %v75, %v63
  %vm116 = vcmp.eq.s32.totalorder %v78, %v63
  %vm117 = vcmp.eq.s32.totalorder %v81, %v63
  %vm118 = vcmp.eq.s32.totalorder %v84, %v63
  %vm119 = vcmp.eq.s32.totalorder %v87, %v63
  %vm120 = vcmp.eq.s32.totalorder %v90, %v63
  %vm121 = vcmp.eq.s32.totalorder %v93, %v63
  %vm122 = vcmp.eq.s32.totalorder %v96, %v63
  %vm123 = vcmp.eq.s32.totalorder %v99, %v63
  %vm124 = vcmp.eq.s32.totalorder %v102, %v63
  %vm125 = vcmp.eq.s32.totalorder %v105, %v63
  %vm126 = vcmp.eq.s32.totalorder %v108, %v63
  %vm127 = vcmp.eq.s32.totalorder %v111, %v63
  %v128 = vsel %vm112, 1.0, 0.0
  %v129 = vsel %vm113, 1.0, 0.0
  %v130 = vsel %vm114, 1.0, 0.0
  %v131 = vsel %vm115, 1.0, 0.0
  %v132 = vsel %vm116, 1.0, 0.0
  %v133 = vsel %vm117, 1.0, 0.0
  %v134 = vsel %vm118, 1.0, 0.0
  %v135 = vsel %vm119, 1.0, 0.0
  %v136 = vsel %vm120, 1.0, 0.0
  %v137 = vsel %vm121, 1.0, 0.0
  %v138 = vsel %vm122, 1.0, 0.0
  %v139 = vsel %vm123, 1.0, 0.0
  %v140 = vsel %vm124, 1.0, 0.0
  %v141 = vsel %vm125, 1.0, 0.0
  %v142 = vsel %vm126, 1.0, 0.0
  %v143 = vsel %vm127, 1.0, 0.0
  %v144 = vld [vmem:[%s2] sm:$0xff]
  %v145 = vld [vmem:[%s2 + $0x8] sm:$0xff]
  %v146 = vld [vmem:[%s2 + $0x10] sm:$0xff]
  %v147 = vld [vmem:[%s2 + $0x18] sm:$0xff]
  %v148 = vld [vmem:[%s2 + $0x20] sm:$0xff]
  %v149 = vld [vmem:[%s2 + $0x28] sm:$0xff]
  %v150 = vld [vmem:[%s2 + $0x30] sm:$0x3]
  %vm151 = vcmask 408576
  %v153 = vsel %vm151, %v128, 0
  %v156 = vsel %vm151, %v129, 0
  %v159 = vsel %vm151, %v130, 0
  %v162 = vsel %vm151, %v131, 0
  %v165 = vsel %vm151, %v132, 0
  %v168 = vsel %vm151, %v133, 0
  %v171 = vsel %vm151, %v134, 0
  %v174 = vsel %vm151, %v135, 0
  %v177 = vsel %vm151, %v136, 0
  %v180 = vsel %vm151, %v137, 0
  %v183 = vsel %vm151, %v138, 0
  %v186 = vsel %vm151, %v139, 0
  %v189 = vsel %vm151, %v140, 0
  %v192 = vsel %vm151, %v141, 0
  %v195 = vsel %vm151, %v142, 0
  %v198 = vsel %vm151, %v143, 0
  %vm200 = vcmask 1041408
  %v202 = vsel %vm200, %v150, 0
  %204 = vmatprep.subr.mxu0 0.0
  %205 = vmatpush1.msra.mxu0 %v144
  %206 = vmatprep.subr.mxu0 0.0
  %207 = vmatpush1.msra.mxu0 %v145
  %208 = vmatprep.subr.mxu0 0.0
  %209 = vmatpush1.msra.mxu0 %v146
  %210 = vmatprep.subr.mxu0 0.0
  %211 = vmatpush1.msra.mxu0 %v147
  %212 = vmatprep.subr.mxu0 0.0
  %213 = vmatpush1.msra.mxu0 %v148
  %214 = vmatprep.subr.mxu0 0.0
  %215 = vmatpush1.msra.mxu0 %v149
  %216 = vmatprep.subr.mxu0 0.0
  %217 = vmatpush1.msra.mxu0 %v202
  %218 = vmatprep.subr.mxu0 0.0
  %219 = vmatpush1.msra.mxu0 0.0
  %220 = vmatprep.subr.mxu0 0.0
  %221 = vmatpush1.msra.mxu0 0.0
  %222 = vmatprep.subr.mxu0 0.0
  %223 = vmatpush1.msra.mxu0 0.0
  %224 = vmatprep.subr.mxu0 0.0
  %225 = vmatpush1.msra.mxu0 0.0
  %226 = vmatprep.subr.mxu0 0.0
  %227 = vmatpush1.msra.mxu0 0.0
  %228 = vmatprep.subr.mxu0 0.0
  %229 = vmatpush1.msra.mxu0 0.0
  %230 = vmatprep.subr.mxu0 0.0
  %231 = vmatpush1.msra.mxu0 0.0
  %232 = vmatprep.subr.mxu0 0.0
  %233 = vmatpush1.msra.mxu0 0.0
  %234 = vmatprep.subr.mxu0 0.0
  %235 = vmatpush1.msra.mxu0 0.0
  %236 = vmatprep.subr.mxu0 0.0
  %237 = vmatpush1.msra.mxu0 0.0
  %238 = vmatprep.subr.mxu0 0.0
  %239 = vmatpush1.msra.mxu0 0.0
  %240 = vmatprep.subr.mxu0 0.0
  %241 = vmatpush1.msra.mxu0 0.0
  %242 = vmatprep.subr.mxu0 0.0
  %243 = vmatpush1.msra.mxu0 0.0
  %244 = vmatprep.subr.mxu0 0.0
  %245 = vmatpush1.msra.mxu0 0.0
  %246 = vmatprep.subr.mxu0 0.0
  %247 = vmatpush1.msra.mxu0 0.0
  %248 = vmatprep.subr.mxu0 0.0
  %249 = vmatpush1.msra.mxu0 0.0
  %250 = vmatprep.subr.mxu0 0.0
  %251 = vmatpush1.msra.mxu0 0.0
  %252 = vmatprep.subr.mxu0 0.0
  %253 = vmatpush1.msra.mxu0 0.0
  %254 = vmatprep.subr.mxu0 0.0
  %255 = vmatpush1.msra.mxu0 0.0
  %256 = vmatprep.subr.mxu0 0.0
  %257 = vmatpush1.msra.mxu0 0.0
  %258 = vmatprep.subr.mxu0 0.0
  %259 = vmatpush1.msra.mxu0 0.0
  %260 = vmatprep.subr.mxu0 0.0
  %261 = vmatpush1.msra.mxu0 0.0
  %262 = vmatprep.subr.mxu0 0.0
  %263 = vmatpush1.msra.mxu0 0.0
  %264 = vmatprep.subr.mxu0 0.0
  %265 = vmatpush1.msra.mxu0 0.0
  %266 = vmatprep.subr.mxu0 0.0
  %267 = vmatpush1.msra.mxu0 0.0
  %268 = vmatprep.mubr.f32.mxu0 0.0
  %269 = vmatmul.mubr.f32.gmra.mrb[0].mxu0 %v153
  %v270 = vpop.f32.mrb[0].mxu0
  %v271 = vadd.f32 0.0, %v270
  %v272 = vpop.f32.mrb[0].mxu0
  %273 = vmatprep.mubr.f32.mxu0 0.0
  %274 = vmatmul.mubr.f32.gmra.mrb[0].mxu0 %v156
  %v275 = vpop.f32.mrb[0].mxu0
  %v276 = vadd.f32 0.0, %v275
  %v277 = vpop.f32.mrb[0].mxu0
  %278 = vmatprep.mubr.f32.mxu0 0.0
  %279 = vmatmul.mubr.f32.gmra.mrb[0].mxu0 %v159
  %v280 = vpop.f32.mrb[0].mxu0
  %v281 = vadd.f32 0.0, %v280
  %v282 = vpop.f32.mrb[0].mxu0
  %283 = vmatprep.mubr.f32.mxu0 0.0
  %284 = vmatmul.mubr.f32.gmra.mrb[0].mxu0 %v162
  %v285 = vpop.f32.mrb[0].mxu0
  %v286 = vadd.f32 0.0, %v285
  %v287 = vpop.f32.mrb[0].mxu0
  %288 = vmatprep.mubr.f32.mxu0 0.0
  %289 = vmatmul.mubr.f32.gmra.mrb[0].mxu0 %v165
  %v290 = vpop.f32.mrb[0].mxu0
  %v291 = vadd.f32 0.0, %v290
  %v292 = vpop.f32.mrb[0].mxu0
  %293 = vmatprep.mubr.f32.mxu0 0.0
  %294 = vmatmul.mubr.f32.gmra.mrb[0].mxu0 %v168
  %v295 = vpop.f32.mrb[0].mxu0
  %v296 = vadd.f32 0.0, %v295
  %v297 = vpop.f32.mrb[0].mxu0
  %298 = vmatprep.mubr.f32.mxu0 0.0
  %299 = vmatmul.mubr.f32.gmra.mrb[0].mxu0 %v171
  %v300 = vpop.f32.mrb[0].mxu0
  %v301 = vadd.f32 0.0, %v300
  %v302 = vpop.f32.mrb[0].mxu0
  %303 = vmatprep.mubr.f32.mxu0 0.0
  %304 = vmatmul.mubr.f32.gmra.mrb[0].mxu0 %v174
  %v305 = vpop.f32.mrb[0].mxu0
  %v306 = vadd.f32 0.0, %v305
  %v307 = vpop.f32.mrb[0].mxu0
  %308 = vmatprep.mubr.f32.mxu0 0.0
  %309 = vmatmul.mubr.f32.gmra.mrb[0].mxu0 %v177
  %v310 = vpop.f32.mrb[0].mxu0
  %v311 = vadd.f32 0.0, %v310
  %v312 = vpop.f32.mrb[0].mxu0
  %313 = vmatprep.mubr.f32.mxu0 0.0
  %314 = vmatmul.mubr.f32.gmra.mrb[0].mxu0 %v180
  %v315 = vpop.f32.mrb[0].mxu0
  %v316 = vadd.f32 0.0, %v315
  %v317 = vpop.f32.mrb[0].mxu0
  %318 = vmatprep.mubr.f32.mxu0 0.0
  %319 = vmatmul.mubr.f32.gmra.mrb[0].mxu0 %v183
  %v320 = vpop.f32.mrb[0].mxu0
  %v321 = vadd.f32 0.0, %v320
  %v322 = vpop.f32.mrb[0].mxu0
  %323 = vmatprep.mubr.f32.mxu0 0.0
  %324 = vmatmul.mubr.f32.gmra.mrb[0].mxu0 %v186
  %v325 = vpop.f32.mrb[0].mxu0
  %v326 = vadd.f32 0.0, %v325
  %v327 = vpop.f32.mrb[0].mxu0
  %328 = vmatprep.mubr.f32.mxu0 0.0
  %329 = vmatmul.mubr.f32.gmra.mrb[0].mxu0 %v189
  %v330 = vpop.f32.mrb[0].mxu0
  %v331 = vadd.f32 0.0, %v330
  %v332 = vpop.f32.mrb[0].mxu0
  %333 = vmatprep.mubr.f32.mxu0 0.0
  %334 = vmatmul.mubr.f32.gmra.mrb[0].mxu0 %v192
  %v335 = vpop.f32.mrb[0].mxu0
  %v336 = vadd.f32 0.0, %v335
  %v337 = vpop.f32.mrb[0].mxu0
  %338 = vmatprep.mubr.f32.mxu0 0.0
  %339 = vmatmul.mubr.f32.gmra.mrb[0].mxu0 %v195
  %v340 = vpop.f32.mrb[0].mxu0
  %v341 = vadd.f32 0.0, %v340
  %v342 = vpop.f32.mrb[0].mxu0
  %343 = vmatprep.mubr.f32.mxu0 0.0
  %344 = vmatmul.mubr.f32.gmra.mrb[0].mxu0 %v198
  %v345 = vpop.f32.mrb[0].mxu0
  %v346 = vadd.f32 0.0, %v345
  %v347 = vpop.f32.mrb[0].mxu0
  %348 = vdwg.mxu0
  %v349 = vlaneseq
  %v350 = vshrl.u32 %v349, 7
  %v351 = vadd.s32 %v350, 8
  %v352 = vadd.s32 %v350, 16
  %v353 = vadd.s32 %v350, 24
  %v354 = vadd.s32 %v350, 32
  %v355 = vadd.s32 %v350, 40
  %v356 = vadd.s32 %v350, 48
  %v357 = vadd.s32 %v350, 56
  %v358 = vadd.s32 %v350, 64
  %v359 = vadd.s32 %v350, 72
  %v360 = vadd.s32 %v350, 80
  %v361 = vadd.s32 %v350, 88
  %v362 = vadd.s32 %v350, 96
  %v363 = vadd.s32 %v350, 104
  %v364 = vadd.s32 %v350, 112
  %v365 = vadd.s32 %v350, 120
  %vm366 = vcmp.lt.s32.totalorder %v350, 0
  %v367 = vsub.s32 0, %v350
  %v368 = vsel %vm366, %v367, %v350
  %v369 = vshrl.u32 %v368, 4
  %v370 = vand.u32 %v368, 15
  %v371 = vsub.s32 0, %v370
  %v372 = vsel %vm366, %v371, %v370
  %vm373 = vcmp.lt.s32.totalorder %v351, 0
  %v374 = vsub.s32 0, %v351
  %v375 = vsel %vm373, %v374, %v351
  %v376 = vshrl.u32 %v375, 4
  %v377 = vand.u32 %v375, 15
  %v378 = vsub.s32 0, %v377
  %v379 = vsel %vm373, %v378, %v377
  %vm380 = vcmp.lt.s32.totalorder %v352, 0
  %v381 = vsub.s32 0, %v352
  %v382 = vsel %vm380, %v381, %v352
  %v383 = vshrl.u32 %v382, 4
  %v384 = vand.u32 %v382, 15
  %v385 = vsub.s32 0, %v384
  %v386 = vsel %vm380, %v385, %v384
  %vm387 = vcmp.lt.s32.totalorder %v353, 0
  %v388 = vsub.s32 0, %v353
  %v389 = vsel %vm387, %v388, %v353
  %v390 = vshrl.u32 %v389, 4
  %v391 = vand.u32 %v389, 15
  %v392 = vsub.s32 0, %v391
  %v393 = vsel %vm387, %v392, %v391
  %vm394 = vcmp.lt.s32.totalorder %v354, 0
  %v395 = vsub.s32 0, %v354
  %v396 = vsel %vm394, %v395, %v354
  %v397 = vshrl.u32 %v396, 4
  %v398 = vand.u32 %v396, 15
  %v399 = vsub.s32 0, %v398
  %v400 = vsel %vm394, %v399, %v398
  %vm401 = vcmp.lt.s32.totalorder %v355, 0
  %v402 = vsub.s32 0, %v355
  %v403 = vsel %vm401, %v402, %v355
  %v404 = vshrl.u32 %v403, 4
  %v405 = vand.u32 %v403, 15
  %v406 = vsub.s32 0, %v405
  %v407 = vsel %vm401, %v406, %v405
  %vm408 = vcmp.lt.s32.totalorder %v356, 0
  %v409 = vsub.s32 0, %v356
  %v410 = vsel %vm408, %v409, %v356
  %v411 = vshrl.u32 %v410, 4
  %v412 = vand.u32 %v410, 15
  %v413 = vsub.s32 0, %v412
  %v414 = vsel %vm408, %v413, %v412
  %vm415 = vcmp.lt.s32.totalorder %v357, 0
  %v416 = vsub.s32 0, %v357
  %v417 = vsel %vm415, %v416, %v357
  %v418 = vshrl.u32 %v417, 4
  %v419 = vand.u32 %v417, 15
  %v420 = vsub.s32 0, %v419
  %v421 = vsel %vm415, %v420, %v419
  %vm422 = vcmp.lt.s32.totalorder %v358, 0
  %v423 = vsub.s32 0, %v358
  %v424 = vsel %vm422, %v423, %v358
  %v425 = vshrl.u32 %v424, 4
  %v426 = vand.u32 %v424, 15
  %v427 = vsub.s32 0, %v426
  %v428 = vsel %vm422, %v427, %v426
  %vm429 = vcmp.lt.s32.totalorder %v359, 0
  %v430 = vsub.s32 0, %v359
  %v431 = vsel %vm429, %v430, %v359
  %v432 = vshrl.u32 %v431, 4
  %v433 = vand.u32 %v431, 15
  %v434 = vsub.s32 0, %v433
  %v435 = vsel %vm429, %v434, %v433
  %vm436 = vcmp.lt.s32.totalorder %v360, 0
  %v437 = vsub.s32 0, %v360
  %v438 = vsel %vm436, %v437, %v360
  %v439 = vshrl.u32 %v438, 4
  %v440 = vand.u32 %v438, 15
  %v441 = vsub.s32 0, %v440
  %v442 = vsel %vm436, %v441, %v440
  %vm443 = vcmp.lt.s32.totalorder %v361, 0
  %v444 = vsub.s32 0, %v361
  %v445 = vsel %vm443, %v444, %v361
  %v446 = vshrl.u32 %v445, 4
  %v447 = vand.u32 %v445, 15
  %v448 = vsub.s32 0, %v447
  %v449 = vsel %vm443, %v448, %v447
  %vm450 = vcmp.lt.s32.totalorder %v362, 0
  %v451 = vsub.s32 0, %v362
  %v452 = vsel %vm450, %v451, %v362
  %v453 = vshrl.u32 %v452, 4
  %v454 = vand.u32 %v452, 15
  %v455 = vsub.s32 0, %v454
  %v456 = vsel %vm450, %v455, %v454
  %vm457 = vcmp.lt.s32.totalorder %v363, 0
  %v458 = vsub.s32 0, %v363
  %v459 = vsel %vm457, %v458, %v363
  %v460 = vshrl.u32 %v459, 4
  %v461 = vand.u32 %v459, 15
  %v462 = vsub.s32 0, %v461
  %v463 = vsel %vm457, %v462, %v461
  %vm464 = vcmp.lt.s32.totalorder %v364, 0
  %v465 = vsub.s32 0, %v364
  %v466 = vsel %vm464, %v465, %v364
  %v467 = vshrl.u32 %v466, 4
  %v468 = vand.u32 %v466, 15
  %v469 = vsub.s32 0, %v468
  %v470 = vsel %vm464, %v469, %v468
  %vm471 = vcmp.lt.s32.totalorder %v365, 0
  %v472 = vsub.s32 0, %v365
  %v473 = vsel %vm471, %v472, %v365
  %v474 = vshrl.u32 %v473, 4
  %v475 = vand.u32 %v473, 15
  %v476 = vsub.s32 0, %v475
  %v477 = vsel %vm471, %v476, %v475
  %vm478 = vcmp.ne.s32.totalorder %v372, 0
  %vm479 = vcmp.ne.s32.totalorder %v379, 0
  %vm480 = vcmp.ne.s32.totalorder %v386, 0
  %vm481 = vcmp.ne.s32.totalorder %v393, 0
  %vm482 = vcmp.ne.s32.totalorder %v400, 0
  %vm483 = vcmp.ne.s32.totalorder %v407, 0
  %vm484 = vcmp.ne.s32.totalorder %v414, 0
  %vm485 = vcmp.ne.s32.totalorder %v421, 0
  %vm486 = vcmp.ne.s32.totalorder %v428, 0
  %vm487 = vcmp.ne.s32.totalorder %v435, 0
  %vm488 = vcmp.ne.s32.totalorder %v442, 0
  %vm489 = vcmp.ne.s32.totalorder %v449, 0
  %vm490 = vcmp.ne.s32.totalorder %v456, 0
  %vm491 = vcmp.ne.s32.totalorder %v463, 0
  %vm492 = vcmp.ne.s32.totalorder %v470, 0
  %vm493 = vcmp.ne.s32.totalorder %v477, 0
  %vm494 = vcmp.lt.s32.totalorder %v372, 0
  %vm495 = vcmp.lt.s32.totalorder %v379, 0
  %vm496 = vcmp.lt.s32.totalorder %v386, 0
  %vm497 = vcmp.lt.s32.totalorder %v393, 0
  %vm498 = vcmp.lt.s32.totalorder %v400, 0
  %vm499 = vcmp.lt.s32.totalorder %v407, 0
  %vm500 = vcmp.lt.s32.totalorder %v414, 0
  %vm501 = vcmp.lt.s32.totalorder %v421, 0
  %vm502 = vcmp.lt.s32.totalorder %v428, 0
  %vm503 = vcmp.lt.s32.totalorder %v435, 0
  %vm504 = vcmp.lt.s32.totalorder %v442, 0
  %vm505 = vcmp.lt.s32.totalorder %v449, 0
  %vm506 = vcmp.lt.s32.totalorder %v456, 0
  %vm507 = vcmp.lt.s32.totalorder %v463, 0
  %vm508 = vcmp.lt.s32.totalorder %v470, 0
  %vm509 = vcmp.lt.s32.totalorder %v477, 0
  %vm510 = vmand %vm494, %vm478
  %vm511 = vmand %vm495, %vm479
  %vm512 = vmand %vm496, %vm480
  %vm513 = vmand %vm497, %vm481
  %vm514 = vmand %vm498, %vm482
  %vm515 = vmand %vm499, %vm483
  %vm516 = vmand %vm500, %vm484
  %vm517 = vmand %vm501, %vm485
  %vm518 = vmand %vm502, %vm486
  %vm519 = vmand %vm503, %vm487
  %vm520 = vmand %vm504, %vm488
  %vm521 = vmand %vm505, %vm489
  %vm522 = vmand %vm506, %vm490
  %vm523 = vmand %vm507, %vm491
  %vm524 = vmand %vm508, %vm492
  %vm525 = vmand %vm509, %vm493
  %v526 = vadd.s32 %v372, 16
  %v527 = vadd.s32 %v379, 16
  %v528 = vadd.s32 %v386, 16
  %v529 = vadd.s32 %v393, 16
  %v530 = vadd.s32 %v400, 16
  %v531 = vadd.s32 %v407, 16
  %v532 = vadd.s32 %v414, 16
  %v533 = vadd.s32 %v421, 16
  %v534 = vadd.s32 %v428, 16
  %v535 = vadd.s32 %v435, 16
  %v536 = vadd.s32 %v442, 16
  %v537 = vadd.s32 %v449, 16
  %v538 = vadd.s32 %v456, 16
  %v539 = vadd.s32 %v463, 16
  %v540 = vadd.s32 %v470, 16
  %v541 = vadd.s32 %v477, 16
  %v542 = vsel %vm510, %v526, %v372
  %v543 = vsel %vm511, %v527, %v379
  %v544 = vsel %vm512, %v528, %v386
  %v545 = vsel %vm513, %v529, %v393
  %v546 = vsel %vm514, %v530, %v400
  %v547 = vsel %vm515, %v531, %v407
  %v548 = vsel %vm516, %v532, %v414
  %v549 = vsel %vm517, %v533, %v421
  %v550 = vsel %vm518, %v534, %v428
  %v551 = vsel %vm519, %v535, %v435
  %v552 = vsel %vm520, %v536, %v442
  %v553 = vsel %vm521, %v537, %v449
  %v554 = vsel %vm522, %v538, %v456
  %v555 = vsel %vm523, %v539, %v463
  %v556 = vsel %vm524, %v540, %v470
  %v557 = vsel %vm525, %v541, %v477
  %v558 = vrot.slane %v271, 7
  %v559 = vrot.slane %v276, 7
  %v560 = vrot.slane %v281, 7
  %v561 = vrot.slane %v286, 7
  %v562 = vrot.slane %v291, 7
  %v563 = vrot.slane %v296, 7
  %v564 = vrot.slane %v301, 7
  %v565 = vrot.slane %v306, 7
  %v566 = vrot.slane %v311, 7
  %v567 = vrot.slane %v316, 7
  %v568 = vrot.slane %v321, 7
  %v569 = vrot.slane %v326, 7
  %v570 = vrot.slane %v331, 7
  %v571 = vrot.slane %v336, 7
  %v572 = vrot.slane %v341, 7
  %v573 = vrot.slane %v346, 7
  %vm574 = vcmp.lt.s32.totalorder %v350, 1
  %v575 = vsel %vm574, %v572, %v573
  %v576 = vsel %vm574, %v571, %v572
  %v577 = vsel %vm574, %v570, %v571
  %v578 = vsel %vm574, %v569, %v570
  %v579 = vsel %vm574, %v568, %v569
  %v580 = vsel %vm574, %v567, %v568
  %v581 = vsel %vm574, %v566, %v567
  %v582 = vsel %vm574, %v565, %v566
  %v583 = vsel %vm574, %v564, %v565
  %v584 = vsel %vm574, %v563, %v564
  %v585 = vsel %vm574, %v562, %v563
  %v586 = vsel %vm574, %v561, %v562
  %v587 = vsel %vm574, %v560, %v561
  %v588 = vsel %vm574, %v559, %v560
  %v589 = vsel %vm574, %v558, %v559
  %v590 = vsel %vm574, %v573, %v558
  %vm591 = vcmp.ge.s32.totalorder %v542, 1
  %vm592 = vcmp.ge.s32.totalorder %v543, 1
  %vm593 = vcmp.ge.s32.totalorder %v544, 1
  %vm594 = vcmp.ge.s32.totalorder %v545, 1
  %vm595 = vcmp.ge.s32.totalorder %v546, 1
  %vm596 = vcmp.ge.s32.totalorder %v547, 1
  %vm597 = vcmp.ge.s32.totalorder %v548, 1
  %vm598 = vcmp.ge.s32.totalorder %v549, 1
  %vm599 = vcmp.ge.s32.totalorder %v550, 1
  %vm600 = vcmp.ge.s32.totalorder %v551, 1
  %vm601 = vcmp.ge.s32.totalorder %v552, 1
  %vm602 = vcmp.ge.s32.totalorder %v553, 1
  %vm603 = vcmp.ge.s32.totalorder %v554, 1
  %vm604 = vcmp.ge.s32.totalorder %v555, 1
  %vm605 = vcmp.ge.s32.totalorder %v556, 1
  %vm606 = vcmp.ge.s32.totalorder %v557, 1
  %v607 = vsel %vm591, 1, 0
  %v608 = vsel %vm592, 1, 0
  %v609 = vsel %vm593, 1, 0
  %v610 = vsel %vm594, 1, 0
  %v611 = vsel %vm595, 1, 0
  %v612 = vsel %vm596, 1, 0
  %v613 = vsel %vm597, 1, 0
  %v614 = vsel %vm598, 1, 0
  %v615 = vsel %vm599, 1, 0
  %v616 = vsel %vm600, 1, 0
  %v617 = vsel %vm601, 1, 0
  %v618 = vsel %vm602, 1, 0
  %v619 = vsel %vm603, 1, 0
  %v620 = vsel %vm604, 1, 0
  %v621 = vsel %vm605, 1, 0
  %v622 = vsel %vm606, 1, 0
  %vm623 = vcmp.eq.s32.totalorder %v607, 1
  %vm624 = vcmp.eq.s32.totalorder %v608, 1
  %vm625 = vcmp.eq.s32.totalorder %v609, 1
  %vm626 = vcmp.eq.s32.totalorder %v610, 1
  %vm627 = vcmp.eq.s32.totalorder %v611, 1
  %vm628 = vcmp.eq.s32.totalorder %v612, 1
  %vm629 = vcmp.eq.s32.totalorder %v613, 1
  %vm630 = vcmp.eq.s32.totalorder %v614, 1
  %vm631 = vcmp.eq.s32.totalorder %v615, 1
  %vm632 = vcmp.eq.s32.totalorder %v616, 1
  %vm633 = vcmp.eq.s32.totalorder %v617, 1
  %vm634 = vcmp.eq.s32.totalorder %v618, 1
  %vm635 = vcmp.eq.s32.totalorder %v619, 1
  %vm636 = vcmp.eq.s32.totalorder %v620, 1
  %vm637 = vcmp.eq.s32.totalorder %v621, 1
  %vm638 = vcmp.eq.s32.totalorder %v622, 1
  %v639 = vsel %vm623, %v590, 0.0
  %v640 = vsel %vm624, %v589, 0.0
  %v641 = vsel %vm625, %v588, 0.0
  %v642 = vsel %vm626, %v587, 0.0
  %v643 = vsel %vm627, %v586, 0.0
  %v644 = vsel %vm628, %v585, 0.0
  %v645 = vsel %vm629, %v584, 0.0
  %v646 = vsel %vm630, %v583, 0.0
  %v647 = vsel %vm631, %v582, 0.0
  %v648 = vsel %vm632, %v581, 0.0
  %v649 = vsel %vm633, %v580, 0.0
  %v650 = vsel %vm634, %v579, 0.0
  %v651 = vsel %vm635, %v578, 0.0
  %v652 = vsel %vm636, %v577, 0.0
  %v653 = vsel %vm637, %v576, 0.0
  %v654 = vsel %vm638, %v575, 0.0
  %v655 = vld [vmem:[%s4] sm:$0xff]
  %v656 = vld [vmem:[%s4 + $0x8] sm:$0xff]
  %v657 = vld [vmem:[%s4 + $0x10] sm:$0xff]
  %v658 = vld [vmem:[%s4 + $0x18] sm:$0xff]
  %s659 = scalar_lea.vmem %s4, 32
  %v660 = vld [vmem:[%s659] sm:$0xff]
  %v661 = vld [vmem:[%s659 + $0x8] sm:$0xff]
  %v662 = vld [vmem:[%s659 + $0x10] sm:$0xff]
  %v663 = vld [vmem:[%s659 + $0x18] sm:$0xff]
  %vm664 = vcmask 261120
  %v666 = vsel %vm664, %v271, 0
  %v669 = vsel %vm664, %v276, 0
  %v672 = vsel %vm664, %v281, 0
  %v675 = vsel %vm664, %v286, 0
  %v678 = vsel %vm664, %v291, 0
  %v681 = vsel %vm664, %v296, 0
  %v684 = vsel %vm664, %v301, 0
  %v687 = vsel %vm664, %v306, 0
  %v690 = vsel %vm664, %v311, 0
  %v693 = vsel %vm664, %v316, 0
  %v696 = vsel %vm664, %v321, 0
  %v699 = vsel %vm664, %v326, 0
  %v702 = vsel %vm664, %v331, 0
  %v705 = vsel %vm664, %v336, 0
  %v708 = vsel %vm664, %v341, 0
  %v711 = vsel %vm664, %v346, 0
  %713 = vmatprep.subr.mxu0 0.0
  %714 = vmatpush1.msra.mxu0 %v660
  %715 = vmatprep.subr.mxu0 0.0
  %716 = vmatpush1.msra.mxu0 %v661
  %717 = vmatprep.subr.mxu0 0.0
  %718 = vmatpush1.msra.mxu0 %v662
  %719 = vmatprep.subr.mxu0 0.0
  %720 = vmatpush1.msra.mxu0 %v663
  %721 = vmatprep.subr.mxu0 0.0
  %722 = vmatpush1.msra.mxu0 0.0
  %723 = vmatprep.subr.mxu0 0.0
  %724 = vmatpush1.msra.mxu0 0.0
  %725 = vmatprep.subr.mxu0 0.0
  %726 = vmatpush1.msra.mxu0 0.0
  %727 = vmatprep.subr.mxu0 0.0
  %728 = vmatpush1.msra.mxu0 0.0
  %729 = vmatprep.subr.mxu0 0.0
  %730 = vmatpush1.msra.mxu0 0.0
  %731 = vmatprep.subr.mxu0 0.0
  %732 = vmatpush1.msra.mxu0 0.0
  %733 = vmatprep.subr.mxu0 0.0
  %734 = vmatpush1.msra.mxu0 0.0
  %735 = vmatprep.subr.mxu0 0.0
  %736 = vmatpush1.msra.mxu0 0.0
  %737 = vmatprep.subr.mxu0 0.0
  %738 = vmatpush1.msra.mxu0 0.0
  %739 = vmatprep.subr.mxu0 0.0
  %740 = vmatpush1.msra.mxu0 0.0
  %741 = vmatprep.subr.mxu0 0.0
  %742 = vmatpush1.msra.mxu0 0.0
  %743 = vmatprep.subr.mxu0 0.0
  %744 = vmatpush1.msra.mxu0 0.0
  %745 = vmatprep.subr.mxu0 0.0
  %746 = vmatpush1.msra.mxu0 0.0
  %747 = vmatprep.subr.mxu0 0.0
  %748 = vmatpush1.msra.mxu0 0.0
  %749 = vmatprep.subr.mxu0 0.0
  %750 = vmatpush1.msra.mxu0 0.0
  %751 = vmatprep.subr.mxu0 0.0
  %752 = vmatpush1.msra.mxu0 0.0
  %753 = vmatprep.subr.mxu0 0.0
  %754 = vmatpush1.msra.mxu0 0.0
  %755 = vmatprep.subr.mxu0 0.0
  %756 = vmatpush1.msra.mxu0 0.0
  %757 = vmatprep.subr.mxu0 0.0
  %758 = vmatpush1.msra.mxu0 0.0
  %759 = vmatprep.subr.mxu0 0.0
  %760 = vmatpush1.msra.mxu0 0.0
  %761 = vmatprep.subr.mxu0 0.0
  %762 = vmatpush1.msra.mxu0 0.0
  %763 = vmatprep.subr.mxu0 0.0
  %764 = vmatpush1.msra.mxu0 0.0
  %765 = vmatprep.subr.mxu0 0.0
  %766 = vmatpush1.msra.mxu0 0.0
  %767 = vmatprep.subr.mxu0 0.0
  %768 = vmatpush1.msra.mxu0 0.0
  %769 = vmatprep.subr.mxu0 0.0
  %770 = vmatpush1.msra.mxu0 0.0
  %771 = vmatprep.subr.mxu0 0.0
  %772 = vmatpush1.msra.mxu0 0.0
  %773 = vmatprep.subr.mxu0 0.0
  %774 = vmatpush1.msra.mxu0 0.0
  %775 = vmatprep.subr.mxu0 0.0
  %776 = vmatpush1.msra.mxu0 0.0
  %777 = vmatprep.mubr.f32.mxu0 0.0
  %778 = vmatmul.mubr.f32.gmra.mrb[0].mxu0 %v666
  %v779 = vpop.f32.mrb[0].mxu0
  %v780 = vadd.f32 0.0, %v779
  %v781 = vpop.f32.mrb[0].mxu0
  %782 = vmatprep.mubr.f32.mxu0 0.0
  %783 = vmatmul.mubr.f32.gmra.mrb[0].mxu0 %v669
  %v784 = vpop.f32.mrb[0].mxu0
  %v785 = vadd.f32 0.0, %v784
  %v786 = vpop.f32.mrb[0].mxu0
  %787 = vmatprep.mubr.f32.mxu0 0.0
  %788 = vmatmul.mubr.f32.gmra.mrb[0].mxu0 %v672
  %v789 = vpop.f32.mrb[0].mxu0
  %v790 = vadd.f32 0.0, %v789
  %v791 = vpop.f32.mrb[0].mxu0
  %792 = vmatprep.mubr.f32.mxu0 0.0
  %793 = vmatmul.mubr.f32.gmra.mrb[0].mxu0 %v675
  %v794 = vpop.f32.mrb[0].mxu0
  %v795 = vadd.f32 0.0, %v794
  %v796 = vpop.f32.mrb[0].mxu0
  %797 = vmatprep.mubr.f32.mxu0 0.0
  %798 = vmatmul.mubr.f32.gmra.mrb[0].mxu0 %v678
  %v799 = vpop.f32.mrb[0].mxu0
  %v800 = vadd.f32 0.0, %v799
  %v801 = vpop.f32.mrb[0].mxu0
  %802 = vmatprep.mubr.f32.mxu0 0.0
  %803 = vmatmul.mubr.f32.gmra.mrb[0].mxu0 %v681
  %v804 = vpop.f32.mrb[0].mxu0
  %v805 = vadd.f32 0.0, %v804
  %v806 = vpop.f32.mrb[0].mxu0
  %807 = vmatprep.mubr.f32.mxu0 0.0
  %808 = vmatmul.mubr.f32.gmra.mrb[0].mxu0 %v684
  %v809 = vpop.f32.mrb[0].mxu0
  %v810 = vadd.f32 0.0, %v809
  %v811 = vpop.f32.mrb[0].mxu0
  %812 = vmatprep.mubr.f32.mxu0 0.0
  %813 = vmatmul.mubr.f32.gmra.mrb[0].mxu0 %v687
  %v814 = vpop.f32.mrb[0].mxu0
  %v815 = vadd.f32 0.0, %v814
  %v816 = vpop.f32.mrb[0].mxu0
  %817 = vmatprep.mubr.f32.mxu0 0.0
  %818 = vmatmul.mubr.f32.gmra.mrb[0].mxu0 %v690
  %v819 = vpop.f32.mrb[0].mxu0
  %v820 = vadd.f32 0.0, %v819
  %v821 = vpop.f32.mrb[0].mxu0
  %822 = vmatprep.mubr.f32.mxu0 0.0
  %823 = vmatmul.mubr.f32.gmra.mrb[0].mxu0 %v693
  %v824 = vpop.f32.mrb[0].mxu0
  %v825 = vadd.f32 0.0, %v824
  %v826 = vpop.f32.mrb[0].mxu0
  %827 = vmatprep.mubr.f32.mxu0 0.0
  %828 = vmatmul.mubr.f32.gmra.mrb[0].mxu0 %v696
  %v829 = vpop.f32.mrb[0].mxu0
  %v830 = vadd.f32 0.0, %v829
  %v831 = vpop.f32.mrb[0].mxu0
  %832 = vmatprep.mubr.f32.mxu0 0.0
  %833 = vmatmul.mubr.f32.gmra.mrb[0].mxu0 %v699
  %v834 = vpop.f32.mrb[0].mxu0
  %v835 = vadd.f32 0.0, %v834
  %v836 = vpop.f32.mrb[0].mxu0
  %837 = vmatprep.mubr.f32.mxu0 0.0
  %838 = vmatmul.mubr.f32.gmra.mrb[0].mxu0 %v702
  %v839 = vpop.f32.mrb[0].mxu0
  %v840 = vadd.f32 0.0, %v839
  %v841 = vpop.f32.mrb[0].mxu0
  %842 = vmatprep.mubr.f32.mxu0 0.0
  %843 = vmatmul.mubr.f32.gmra.mrb[0].mxu0 %v705
  %v844 = vpop.f32.mrb[0].mxu0
  %v845 = vadd.f32 0.0, %v844
  %v846 = vpop.f32.mrb[0].mxu0
  %847 = vmatprep.mubr.f32.mxu0 0.0
  %848 = vmatmul.mubr.f32.gmra.mrb[0].mxu0 %v708
  %v849 = vpop.f32.mrb[0].mxu0
  %v850 = vadd.f32 0.0, %v849
  %v851 = vpop.f32.mrb[0].mxu0
  %852 = vmatprep.mubr.f32.mxu0 0.0
  %853 = vmatmul.mubr.f32.gmra.mrb[0].mxu0 %v711
  %v854 = vpop.f32.mrb[0].mxu0
  %v855 = vadd.f32 0.0, %v854
  %v856 = vpop.f32.mrb[0].mxu0
  %857 = vdwg.mxu0
  %v859 = vsel %vm664, %v639, 0
  %v862 = vsel %vm664, %v640, 0
  %v865 = vsel %vm664, %v641, 0
  %v868 = vsel %vm664, %v642, 0
  %v871 = vsel %vm664, %v643, 0
  %v874 = vsel %vm664, %v644, 0
  %v877 = vsel %vm664, %v645, 0
  %v880 = vsel %vm664, %v646, 0
  %v883 = vsel %vm664, %v647, 0
  %v886 = vsel %vm664, %v648, 0
  %v889 = vsel %vm664, %v649, 0
  %v892 = vsel %vm664, %v650, 0
  %v895 = vsel %vm664, %v651, 0
  %v898 = vsel %vm664, %v652, 0
  %v901 = vsel %vm664, %v653, 0
  %v904 = vsel %vm664, %v654, 0
  %906 = vmatprep.subr.mxu0 0.0
  %907 = vmatpush1.msra.mxu0 %v655
  %908 = vmatprep.subr.mxu0 0.0
  %909 = vmatpush1.msra.mxu0 %v656
  %910 = vmatprep.subr.mxu0 0.0
  %911 = vmatpush1.msra.mxu0 %v657
  %912 = vmatprep.subr.mxu0 0.0
  %913 = vmatpush1.msra.mxu0 %v658
  %914 = vmatprep.subr.mxu0 0.0
  %915 = vmatpush1.msra.mxu0 0.0
  %916 = vmatprep.subr.mxu0 0.0
  %917 = vmatpush1.msra.mxu0 0.0
  %918 = vmatprep.subr.mxu0 0.0
  %919 = vmatpush1.msra.mxu0 0.0
  %920 = vmatprep.subr.mxu0 0.0
  %921 = vmatpush1.msra.mxu0 0.0
  %922 = vmatprep.subr.mxu0 0.0
  %923 = vmatpush1.msra.mxu0 0.0
  %924 = vmatprep.subr.mxu0 0.0
  %925 = vmatpush1.msra.mxu0 0.0
  %926 = vmatprep.subr.mxu0 0.0
  %927 = vmatpush1.msra.mxu0 0.0
  %928 = vmatprep.subr.mxu0 0.0
  %929 = vmatpush1.msra.mxu0 0.0
  %930 = vmatprep.subr.mxu0 0.0
  %931 = vmatpush1.msra.mxu0 0.0
  %932 = vmatprep.subr.mxu0 0.0
  %933 = vmatpush1.msra.mxu0 0.0
  %934 = vmatprep.subr.mxu0 0.0
  %935 = vmatpush1.msra.mxu0 0.0
  %936 = vmatprep.subr.mxu0 0.0
  %937 = vmatpush1.msra.mxu0 0.0
  %938 = vmatprep.subr.mxu0 0.0
  %939 = vmatpush1.msra.mxu0 0.0
  %940 = vmatprep.subr.mxu0 0.0
  %941 = vmatpush1.msra.mxu0 0.0
  %942 = vmatprep.subr.mxu0 0.0
  %943 = vmatpush1.msra.mxu0 0.0
  %944 = vmatprep.subr.mxu0 0.0
  %945 = vmatpush1.msra.mxu0 0.0
  %946 = vmatprep.subr.mxu0 0.0
  %947 = vmatpush1.msra.mxu0 0.0
  %948 = vmatprep.subr.mxu0 0.0
  %949 = vmatpush1.msra.mxu0 0.0
  %950 = vmatprep.subr.mxu0 0.0
  %951 = vmatpush1.msra.mxu0 0.0
  %952 = vmatprep.subr.mxu0 0.0
  %953 = vmatpush1.msra.mxu0 0.0
  %954 = vmatprep.subr.mxu0 0.0
  %955 = vmatpush1.msra.mxu0 0.0
  %956 = vmatprep.subr.mxu0 0.0
  %957 = vmatpush1.msra.mxu0 0.0
  %958 = vmatprep.subr.mxu0 0.0
  %959 = vmatpush1.msra.mxu0 0.0
  %960 = vmatprep.subr.mxu0 0.0
  %961 = vmatpush1.msra.mxu0 0.0
  %962 = vmatprep.subr.mxu0 0.0
  %963 = vmatpush1.msra.mxu0 0.0
  %964 = vmatprep.subr.mxu0 0.0
  %965 = vmatpush1.msra.mxu0 0.0
  %966 = vmatprep.subr.mxu0 0.0
  %967 = vmatpush1.msra.mxu0 0.0
  %968 = vmatprep.subr.mxu0 0.0
  %969 = vmatpush1.msra.mxu0 0.0
  %970 = vmatprep.mubr.f32.mxu0 0.0
  %971 = vmatmul.mubr.f32.gmra.mrb[0].mxu0 %v859
  %v972 = vpop.f32.mrb[0].mxu0
  %v973 = vadd.f32 %v780, %v972
  %v974 = vpop.f32.mrb[0].mxu0
  %975 = vmatprep.mubr.f32.mxu0 0.0
  %976 = vmatmul.mubr.f32.gmra.mrb[0].mxu0 %v862
  %v977 = vpop.f32.mrb[0].mxu0
  %v978 = vadd.f32 %v785, %v977
  %v979 = vpop.f32.mrb[0].mxu0
  %980 = vmatprep.mubr.f32.mxu0 0.0
  %981 = vmatmul.mubr.f32.gmra.mrb[0].mxu0 %v865
  %v982 = vpop.f32.mrb[0].mxu0
  %v983 = vadd.f32 %v790, %v982
  %v984 = vpop.f32.mrb[0].mxu0
  %985 = vmatprep.mubr.f32.mxu0 0.0
  %986 = vmatmul.mubr.f32.gmra.mrb[0].mxu0 %v868
  %v987 = vpop.f32.mrb[0].mxu0
  %v988 = vadd.f32 %v795, %v987
  %v989 = vpop.f32.mrb[0].mxu0
  %990 = vmatprep.mubr.f32.mxu0 0.0
  %991 = vmatmul.mubr.f32.gmra.mrb[0].mxu0 %v871
  %v992 = vpop.f32.mrb[0].mxu0
  %v993 = vadd.f32 %v800, %v992
  %v994 = vpop.f32.mrb[0].mxu0
  %995 = vmatprep.mubr.f32.mxu0 0.0
  %996 = vmatmul.mubr.f32.gmra.mrb[0].mxu0 %v874
  %v997 = vpop.f32.mrb[0].mxu0
  %v998 = vadd.f32 %v805, %v997
  %v999 = vpop.f32.mrb[0].mxu0
  %1000 = vmatprep.mubr.f32.mxu0 0.0
  %1001 = vmatmul.mubr.f32.gmra.mrb[0].mxu0 %v877
  %v1002 = vpop.f32.mrb[0].mxu0
  %v1003 = vadd.f32 %v810, %v1002
  %v1004 = vpop.f32.mrb[0].mxu0
  %1005 = vmatprep.mubr.f32.mxu0 0.0
  %1006 = vmatmul.mubr.f32.gmra.mrb[0].mxu0 %v880
  %v1007 = vpop.f32.mrb[0].mxu0
  %v1008 = vadd.f32 %v815, %v1007
  %v1009 = vpop.f32.mrb[0].mxu0
  %1010 = vmatprep.mubr.f32.mxu0 0.0
  %1011 = vmatmul.mubr.f32.gmra.mrb[0].mxu0 %v883
  %v1012 = vpop.f32.mrb[0].mxu0
  %v1013 = vadd.f32 %v820, %v1012
  %v1014 = vpop.f32.mrb[0].mxu0
  %1015 = vmatprep.mubr.f32.mxu0 0.0
  %1016 = vmatmul.mubr.f32.gmra.mrb[0].mxu0 %v886
  %v1017 = vpop.f32.mrb[0].mxu0
  %v1018 = vadd.f32 %v825, %v1017
  %v1019 = vpop.f32.mrb[0].mxu0
  %1020 = vmatprep.mubr.f32.mxu0 0.0
  %1021 = vmatmul.mubr.f32.gmra.mrb[0].mxu0 %v889
  %v1022 = vpop.f32.mrb[0].mxu0
  %v1023 = vadd.f32 %v830, %v1022
  %v1024 = vpop.f32.mrb[0].mxu0
  %1025 = vmatprep.mubr.f32.mxu0 0.0
  %1026 = vmatmul.mubr.f32.gmra.mrb[0].mxu0 %v892
  %v1027 = vpop.f32.mrb[0].mxu0
  %v1028 = vadd.f32 %v835, %v1027
  %v1029 = vpop.f32.mrb[0].mxu0
  %1030 = vmatprep.mubr.f32.mxu0 0.0
  %1031 = vmatmul.mubr.f32.gmra.mrb[0].mxu0 %v895
  %v1032 = vpop.f32.mrb[0].mxu0
  %v1033 = vadd.f32 %v840, %v1032
  %v1034 = vpop.f32.mrb[0].mxu0
  %1035 = vmatprep.mubr.f32.mxu0 0.0
  %1036 = vmatmul.mubr.f32.gmra.mrb[0].mxu0 %v898
  %v1037 = vpop.f32.mrb[0].mxu0
  %v1038 = vadd.f32 %v845, %v1037
  %v1039 = vpop.f32.mrb[0].mxu0
  %1040 = vmatprep.mubr.f32.mxu0 0.0
  %1041 = vmatmul.mubr.f32.gmra.mrb[0].mxu0 %v901
  %v1042 = vpop.f32.mrb[0].mxu0
  %v1043 = vadd.f32 %v850, %v1042
  %v1044 = vpop.f32.mrb[0].mxu0
  %1045 = vmatprep.mubr.f32.mxu0 0.0
  %1046 = vmatmul.mubr.f32.gmra.mrb[0].mxu0 %v904
  %v1047 = vpop.f32.mrb[0].mxu0
  %v1048 = vadd.f32 %v855, %v1047
  %v1049 = vpop.f32.mrb[0].mxu0
  %1050 = vdwg.mxu0
  %v1051 = vrot.slane %v271, 1
  %v1052 = vrot.slane %v276, 1
  %v1053 = vrot.slane %v281, 1
  %v1054 = vrot.slane %v286, 1
  %v1055 = vrot.slane %v291, 1
  %v1056 = vrot.slane %v296, 1
  %v1057 = vrot.slane %v301, 1
  %v1058 = vrot.slane %v306, 1
  %v1059 = vrot.slane %v311, 1
  %v1060 = vrot.slane %v316, 1
  %v1061 = vrot.slane %v321, 1
  %v1062 = vrot.slane %v326, 1
  %v1063 = vrot.slane %v331, 1
  %v1064 = vrot.slane %v336, 1
  %v1065 = vrot.slane %v341, 1
  %v1066 = vrot.slane %v346, 1
  %vm1067 = vcmp.lt.s32.totalorder %v350, 7
  %v1068 = vsel %vm1067, %v1065, %v1066
  %v1069 = vsel %vm1067, %v1064, %v1065
  %v1070 = vsel %vm1067, %v1063, %v1064
  %v1071 = vsel %vm1067, %v1062, %v1063
  %v1072 = vsel %vm1067, %v1061, %v1062
  %v1073 = vsel %vm1067, %v1060, %v1061
  %v1074 = vsel %vm1067, %v1059, %v1060
  %v1075 = vsel %vm1067, %v1058, %v1059
  %v1076 = vsel %vm1067, %v1057, %v1058
  %v1077 = vsel %vm1067, %v1056, %v1057
  %v1078 = vsel %vm1067, %v1055, %v1056
  %v1079 = vsel %vm1067, %v1054, %v1055
  %v1080 = vsel %vm1067, %v1053, %v1054
  %v1081 = vsel %vm1067, %v1052, %v1053
  %v1082 = vsel %vm1067, %v1051, %v1052
  %v1083 = vsel %vm1067, %v1066, %v1051
  %vm1084 = vcmp.lt.s32.totalorder %v542, 15
  %vm1085 = vcmp.lt.s32.totalorder %v543, 15
  %vm1086 = vcmp.lt.s32.totalorder %v544, 15
  %vm1087 = vcmp.lt.s32.totalorder %v545, 15
  %vm1088 = vcmp.lt.s32.totalorder %v546, 15
  %vm1089 = vcmp.lt.s32.totalorder %v547, 15
  %vm1090 = vcmp.lt.s32.totalorder %v548, 15
  %vm1091 = vcmp.lt.s32.totalorder %v549, 15
  %vm1092 = vcmp.lt.s32.totalorder %v550, 15
  %vm1093 = vcmp.lt.s32.totalorder %v551, 15
  %vm1094 = vcmp.lt.s32.totalorder %v552, 15
  %vm1095 = vcmp.lt.s32.totalorder %v553, 15
  %vm1096 = vcmp.lt.s32.totalorder %v554, 15
  %vm1097 = vcmp.lt.s32.totalorder %v555, 15
  %vm1098 = vcmp.lt.s32.totalorder %v556, 15
  %vm1099 = vcmp.lt.s32.totalorder %v557, 15
  %v1100 = vsel %vm1084, 1, 0
  %v1101 = vsel %vm1085, 1, 0
  %v1102 = vsel %vm1086, 1, 0
  %v1103 = vsel %vm1087, 1, 0
  %v1104 = vsel %vm1088, 1, 0
  %v1105 = vsel %vm1089, 1, 0
  %v1106 = vsel %vm1090, 1, 0
  %v1107 = vsel %vm1091, 1, 0
  %v1108 = vsel %vm1092, 1, 0
  %v1109 = vsel %vm1093, 1, 0
  %v1110 = vsel %vm1094, 1, 0
  %v1111 = vsel %vm1095, 1, 0
  %v1112 = vsel %vm1096, 1, 0
  %v1113 = vsel %vm1097, 1, 0
  %v1114 = vsel %vm1098, 1, 0
  %v1115 = vsel %vm1099, 1, 0
  %vm1116 = vcmp.eq.s32.totalorder %v1100, 1
  %vm1117 = vcmp.eq.s32.totalorder %v1101, 1
  %vm1118 = vcmp.eq.s32.totalorder %v1102, 1
  %vm1119 = vcmp.eq.s32.totalorder %v1103, 1
  %vm1120 = vcmp.eq.s32.totalorder %v1104, 1
  %vm1121 = vcmp.eq.s32.totalorder %v1105, 1
  %vm1122 = vcmp.eq.s32.totalorder %v1106, 1
  %vm1123 = vcmp.eq.s32.totalorder %v1107, 1
  %vm1124 = vcmp.eq.s32.totalorder %v1108, 1
  %vm1125 = vcmp.eq.s32.totalorder %v1109, 1
  %vm1126 = vcmp.eq.s32.totalorder %v1110, 1
  %vm1127 = vcmp.eq.s32.totalorder %v1111, 1
  %vm1128 = vcmp.eq.s32.totalorder %v1112, 1
  %vm1129 = vcmp.eq.s32.totalorder %v1113, 1
  %vm1130 = vcmp.eq.s32.totalorder %v1114, 1
  %vm1131 = vcmp.eq.s32.totalorder %v1115, 1
  %v1132 = vsel %vm1116, %v1082, 0.0
  %v1133 = vsel %vm1117, %v1081, 0.0
  %v1134 = vsel %vm1118, %v1080, 0.0
  %v1135 = vsel %vm1119, %v1079, 0.0
  %v1136 = vsel %vm1120, %v1078, 0.0
  %v1137 = vsel %vm1121, %v1077, 0.0
  %v1138 = vsel %vm1122, %v1076, 0.0
  %v1139 = vsel %vm1123, %v1075, 0.0
  %v1140 = vsel %vm1124, %v1074, 0.0
  %v1141 = vsel %vm1125, %v1073, 0.0
  %v1142 = vsel %vm1126, %v1072, 0.0
  %v1143 = vsel %vm1127, %v1071, 0.0
  %v1144 = vsel %vm1128, %v1070, 0.0
  %v1145 = vsel %vm1129, %v1069, 0.0
  %v1146 = vsel %vm1130, %v1068, 0.0
  %v1147 = vsel %vm1131, %v1083, 0.0
  %s1148 = scalar_lea.vmem %s4, 64
  %v1149 = vld [vmem:[%s1148] sm:$0xff]
  %v1150 = vld [vmem:[%s1148 + $0x8] sm:$0xff]
  %v1151 = vld [vmem:[%s1148 + $0x10] sm:$0xff]
  %v1152 = vld [vmem:[%s1148 + $0x18] sm:$0xff]
  %v1154 = vsel %vm664, %v1132, 0
  %v1157 = vsel %vm664, %v1133, 0
  %v1160 = vsel %vm664, %v1134, 0
  %v1163 = vsel %vm664, %v1135, 0
  %v1166 = vsel %vm664, %v1136, 0
  %v1169 = vsel %vm664, %v1137, 0
  %v1172 = vsel %vm664, %v1138, 0
  %v1175 = vsel %vm664, %v1139, 0
  %v1178 = vsel %vm664, %v1140, 0
  %v1181 = vsel %vm664, %v1141, 0
  %v1184 = vsel %vm664, %v1142, 0
  %v1187 = vsel %vm664, %v1143, 0
  %v1190 = vsel %vm664, %v1144, 0
  %v1193 = vsel %vm664, %v1145, 0
  %v1196 = vsel %vm664, %v1146, 0
  %v1199 = vsel %vm664, %v1147, 0
  %1201 = vmatprep.subr.mxu0 0.0
  %1202 = vmatpush1.msra.mxu0 %v1149
  %1203 = vmatprep.subr.mxu0 0.0
  %1204 = vmatpush1.msra.mxu0 %v1150
  %1205 = vmatprep.subr.mxu0 0.0
  %1206 = vmatpush1.msra.mxu0 %v1151
  %1207 = vmatprep.subr.mxu0 0.0
  %1208 = vmatpush1.msra.mxu0 %v1152
  %1209 = vmatprep.subr.mxu0 0.0
  %1210 = vmatpush1.msra.mxu0 0.0
  %1211 = vmatprep.subr.mxu0 0.0
  %1212 = vmatpush1.msra.mxu0 0.0
  %1213 = vmatprep.subr.mxu0 0.0
  %1214 = vmatpush1.msra.mxu0 0.0
  %1215 = vmatprep.subr.mxu0 0.0
  %1216 = vmatpush1.msra.mxu0 0.0
  %1217 = vmatprep.subr.mxu0 0.0
  %1218 = vmatpush1.msra.mxu0 0.0
  %1219 = vmatprep.subr.mxu0 0.0
  %1220 = vmatpush1.msra.mxu0 0.0
  %1221 = vmatprep.subr.mxu0 0.0
  %1222 = vmatpush1.msra.mxu0 0.0
  %1223 = vmatprep.subr.mxu0 0.0
  %1224 = vmatpush1.msra.mxu0 0.0
  %1225 = vmatprep.subr.mxu0 0.0
  %1226 = vmatpush1.msra.mxu0 0.0
  %1227 = vmatprep.subr.mxu0 0.0
  %1228 = vmatpush1.msra.mxu0 0.0
  %1229 = vmatprep.subr.mxu0 0.0
  %1230 = vmatpush1.msra.mxu0 0.0
  %1231 = vmatprep.subr.mxu0 0.0
  %1232 = vmatpush1.msra.mxu0 0.0
  %1233 = vmatprep.subr.mxu0 0.0
  %1234 = vmatpush1.msra.mxu0 0.0
  %1235 = vmatprep.subr.mxu0 0.0
  %1236 = vmatpush1.msra.mxu0 0.0
  %1237 = vmatprep.subr.mxu0 0.0
  %1238 = vmatpush1.msra.mxu0 0.0
  %1239 = vmatprep.subr.mxu0 0.0
  %1240 = vmatpush1.msra.mxu0 0.0
  %1241 = vmatprep.subr.mxu0 0.0
  %1242 = vmatpush1.msra.mxu0 0.0
  %1243 = vmatprep.subr.mxu0 0.0
  %1244 = vmatpush1.msra.mxu0 0.0
  %1245 = vmatprep.subr.mxu0 0.0
  %1246 = vmatpush1.msra.mxu0 0.0
  %1247 = vmatprep.subr.mxu0 0.0
  %1248 = vmatpush1.msra.mxu0 0.0
  %1249 = vmatprep.subr.mxu0 0.0
  %1250 = vmatpush1.msra.mxu0 0.0
  %1251 = vmatprep.subr.mxu0 0.0
  %1252 = vmatpush1.msra.mxu0 0.0
  %1253 = vmatprep.subr.mxu0 0.0
  %1254 = vmatpush1.msra.mxu0 0.0
  %1255 = vmatprep.subr.mxu0 0.0
  %1256 = vmatpush1.msra.mxu0 0.0
  %1257 = vmatprep.subr.mxu0 0.0
  %1258 = vmatpush1.msra.mxu0 0.0
  %1259 = vmatprep.subr.mxu0 0.0
  %1260 = vmatpush1.msra.mxu0 0.0
  %1261 = vmatprep.subr.mxu0 0.0
  %1262 = vmatpush1.msra.mxu0 0.0
  %1263 = vmatprep.subr.mxu0 0.0
  %1264 = vmatpush1.msra.mxu0 0.0
  %1265 = vmatprep.mubr.f32.mxu0 0.0
  %1266 = vmatmul.mubr.f32.gmra.mrb[0].mxu0 %v1154
  %v1267 = vpop.f32.mrb[0].mxu0
  %v1268 = vadd.f32 0.0, %v1267
  %v1269 = vpop.f32.mrb[0].mxu0
  %1270 = vmatprep.mubr.f32.mxu0 0.0
  %1271 = vmatmul.mubr.f32.gmra.mrb[0].mxu0 %v1157
  %v1272 = vpop.f32.mrb[0].mxu0
  %v1273 = vadd.f32 0.0, %v1272
  %v1274 = vpop.f32.mrb[0].mxu0
  %1275 = vmatprep.mubr.f32.mxu0 0.0
  %1276 = vmatmul.mubr.f32.gmra.mrb[0].mxu0 %v1160
  %v1277 = vpop.f32.mrb[0].mxu0
  %v1278 = vadd.f32 0.0, %v1277
  %v1279 = vpop.f32.mrb[0].mxu0
  %1280 = vmatprep.mubr.f32.mxu0 0.0
  %1281 = vmatmul.mubr.f32.gmra.mrb[0].mxu0 %v1163
  %v1282 = vpop.f32.mrb[0].mxu0
  %v1283 = vadd.f32 0.0, %v1282
  %v1284 = vpop.f32.mrb[0].mxu0
  %1285 = vmatprep.mubr.f32.mxu0 0.0
  %1286 = vmatmul.mubr.f32.gmra.mrb[0].mxu0 %v1166
  %v1287 = vpop.f32.mrb[0].mxu0
  %v1288 = vadd.f32 0.0, %v1287
  %v1289 = vpop.f32.mrb[0].mxu0
  %1290 = vmatprep.mubr.f32.mxu0 0.0
  %1291 = vmatmul.mubr.f32.gmra.mrb[0].mxu0 %v1169
  %v1292 = vpop.f32.mrb[0].mxu0
  %v1293 = vadd.f32 0.0, %v1292
  %v1294 = vpop.f32.mrb[0].mxu0
  %1295 = vmatprep.mubr.f32.mxu0 0.0
  %1296 = vmatmul.mubr.f32.gmra.mrb[0].mxu0 %v1172
  %v1297 = vpop.f32.mrb[0].mxu0
  %v1298 = vadd.f32 0.0, %v1297
  %v1299 = vpop.f32.mrb[0].mxu0
  %1300 = vmatprep.mubr.f32.mxu0 0.0
  %1301 = vmatmul.mubr.f32.gmra.mrb[0].mxu0 %v1175
  %v1302 = vpop.f32.mrb[0].mxu0
  %v1303 = vadd.f32 0.0, %v1302
  %v1304 = vpop.f32.mrb[0].mxu0
  %1305 = vmatprep.mubr.f32.mxu0 0.0
  %1306 = vmatmul.mubr.f32.gmra.mrb[0].mxu0 %v1178
  %v1307 = vpop.f32.mrb[0].mxu0
  %v1308 = vadd.f32 0.0, %v1307
  %v1309 = vpop.f32.mrb[0].mxu0
  %1310 = vmatprep.mubr.f32.mxu0 0.0
  %1311 = vmatmul.mubr.f32.gmra.mrb[0].mxu0 %v1181
  %v1312 = vpop.f32.mrb[0].mxu0
  %v1313 = vadd.f32 0.0, %v1312
  %v1314 = vpop.f32.mrb[0].mxu0
  %1315 = vmatprep.mubr.f32.mxu0 0.0
  %1316 = vmatmul.mubr.f32.gmra.mrb[0].mxu0 %v1184
  %v1317 = vpop.f32.mrb[0].mxu0
  %v1318 = vadd.f32 0.0, %v1317
  %v1319 = vpop.f32.mrb[0].mxu0
  %1320 = vmatprep.mubr.f32.mxu0 0.0
  %1321 = vmatmul.mubr.f32.gmra.mrb[0].mxu0 %v1187
  %v1322 = vpop.f32.mrb[0].mxu0
  %v1323 = vadd.f32 0.0, %v1322
  %v1324 = vpop.f32.mrb[0].mxu0
  %1325 = vmatprep.mubr.f32.mxu0 0.0
  %1326 = vmatmul.mubr.f32.gmra.mrb[0].mxu0 %v1190
  %v1327 = vpop.f32.mrb[0].mxu0
  %v1328 = vadd.f32 0.0, %v1327
  %v1329 = vpop.f32.mrb[0].mxu0
  %1330 = vmatprep.mubr.f32.mxu0 0.0
  %1331 = vmatmul.mubr.f32.gmra.mrb[0].mxu0 %v1193
  %v1332 = vpop.f32.mrb[0].mxu0
  %v1333 = vadd.f32 0.0, %v1332
  %v1334 = vpop.f32.mrb[0].mxu0
  %1335 = vmatprep.mubr.f32.mxu0 0.0
  %1336 = vmatmul.mubr.f32.gmra.mrb[0].mxu0 %v1196
  %v1337 = vpop.f32.mrb[0].mxu0
  %v1338 = vadd.f32 0.0, %v1337
  %v1339 = vpop.f32.mrb[0].mxu0
  %1340 = vmatprep.mubr.f32.mxu0 0.0
  %1341 = vmatmul.mubr.f32.gmra.mrb[0].mxu0 %v1199
  %v1342 = vpop.f32.mrb[0].mxu0
  %v1343 = vadd.f32 0.0, %v1342
  %v1344 = vpop.f32.mrb[0].mxu0
  %1345 = vdwg.mxu0
  %v1346 = vadd.f32 %v973, %v1268
  %v1347 = vadd.f32 %v978, %v1273
  %v1348 = vadd.f32 %v983, %v1278
  %v1349 = vadd.f32 %v988, %v1283
  %v1350 = vadd.f32 %v993, %v1288
  %v1351 = vadd.f32 %v998, %v1293
  %v1352 = vadd.f32 %v1003, %v1298
  %v1353 = vadd.f32 %v1008, %v1303
  %v1354 = vadd.f32 %v1013, %v1308
  %v1355 = vadd.f32 %v1018, %v1313
  %v1356 = vadd.f32 %v1023, %v1318
  %v1357 = vadd.f32 %v1028, %v1323
  %v1358 = vadd.f32 %v1033, %v1328
  %v1359 = vadd.f32 %v1038, %v1333
  %v1360 = vadd.f32 %v1043, %v1338
  %v1361 = vadd.f32 %v1048, %v1343
  %v1362 = vld [vmem:[%s5] sm:$0x1]
  %v1364 = vlaneseq
  %v1365 = vshrl.u32 %v1364, 7
  %v1366 = vsub.s32 0, %v1365
  %v1367 = vrot.slane %v1362, %v1366
  %v1369 = vadd.f32 %v1346, %v1367
  %v1370 = vadd.f32 %v1347, %v1367
  %v1371 = vadd.f32 %v1348, %v1367
  %v1372 = vadd.f32 %v1349, %v1367
  %v1373 = vadd.f32 %v1350, %v1367
  %v1374 = vadd.f32 %v1351, %v1367
  %v1375 = vadd.f32 %v1352, %v1367
  %v1376 = vadd.f32 %v1353, %v1367
  %v1377 = vadd.f32 %v1354, %v1367
  %v1378 = vadd.f32 %v1355, %v1367
  %v1379 = vadd.f32 %v1356, %v1367
  %v1380 = vadd.f32 %v1357, %v1367
  %v1381 = vadd.f32 %v1358, %v1367
  %v1382 = vadd.f32 %v1359, %v1367
  %v1383 = vadd.f32 %v1360, %v1367
  %v1384 = vadd.f32 %v1361, %v1367
  %v1385 = vmax.f32 %v1369, 0.0
  %v1386 = vmax.f32 %v1370, 0.0
  %v1387 = vmax.f32 %v1371, 0.0
  %v1388 = vmax.f32 %v1372, 0.0
  %v1389 = vmax.f32 %v1373, 0.0
  %v1390 = vmax.f32 %v1374, 0.0
  %v1391 = vmax.f32 %v1375, 0.0
  %v1392 = vmax.f32 %v1376, 0.0
  %v1393 = vmax.f32 %v1377, 0.0
  %v1394 = vmax.f32 %v1378, 0.0
  %v1395 = vmax.f32 %v1379, 0.0
  %v1396 = vmax.f32 %v1380, 0.0
  %v1397 = vmax.f32 %v1381, 0.0
  %v1398 = vmax.f32 %v1382, 0.0
  %v1399 = vmax.f32 %v1383, 0.0
  %v1400 = vmax.f32 %v1384, 0.0
  %v1401 = vsel %vm664, %v1385, -inf
  %v1402 = vsel %vm664, %v1386, -inf
  %v1403 = vmax.f32 %v1401, %v1402
  %v1404 = vrot.slane %v1403, 4
  %v1405 = vmax.f32 %v1403, %v1404
  %v1406 = vrot.slane %v1405, 2
  %v1407 = vmax.f32 %v1405, %v1406
  %v1408 = vrot.slane %v1407, 1
  %v1409 = vmax.f32 %v1407, %v1408
  %v1410 = vsel %vm664, %v1387, -inf
  %v1411 = vsel %vm664, %v1388, -inf
  %v1412 = vmax.f32 %v1410, %v1411
  %v1413 = vrot.slane %v1412, 4
  %v1414 = vmax.f32 %v1412, %v1413
  %v1415 = vrot.slane %v1414, 2
  %v1416 = vmax.f32 %v1414, %v1415
  %v1417 = vrot.slane %v1416, 1
  %v1418 = vmax.f32 %v1416, %v1417
  %v1419 = vsel %vm664, %v1389, -inf
  %v1420 = vsel %vm664, %v1390, -inf
  %v1421 = vmax.f32 %v1419, %v1420
  %v1422 = vrot.slane %v1421, 4
  %v1423 = vmax.f32 %v1421, %v1422
  %v1424 = vrot.slane %v1423, 2
  %v1425 = vmax.f32 %v1423, %v1424
  %v1426 = vrot.slane %v1425, 1
  %v1427 = vmax.f32 %v1425, %v1426
  %v1428 = vsel %vm664, %v1391, -inf
  %v1429 = vsel %vm664, %v1392, -inf
  %v1430 = vmax.f32 %v1428, %v1429
  %v1431 = vrot.slane %v1430, 4
  %v1432 = vmax.f32 %v1430, %v1431
  %v1433 = vrot.slane %v1432, 2
  %v1434 = vmax.f32 %v1432, %v1433
  %v1435 = vrot.slane %v1434, 1
  %v1436 = vmax.f32 %v1434, %v1435
  %v1437 = vsel %vm664, %v1393, -inf
  %v1438 = vsel %vm664, %v1394, -inf
  %v1439 = vmax.f32 %v1437, %v1438
  %v1440 = vrot.slane %v1439, 4
  %v1441 = vmax.f32 %v1439, %v1440
  %v1442 = vrot.slane %v1441, 2
  %v1443 = vmax.f32 %v1441, %v1442
  %v1444 = vrot.slane %v1443, 1
  %v1445 = vmax.f32 %v1443, %v1444
  %v1446 = vsel %vm664, %v1395, -inf
  %v1447 = vsel %vm664, %v1396, -inf
  %v1448 = vmax.f32 %v1446, %v1447
  %v1449 = vrot.slane %v1448, 4
  %v1450 = vmax.f32 %v1448, %v1449
  %v1451 = vrot.slane %v1450, 2
  %v1452 = vmax.f32 %v1450, %v1451
  %v1453 = vrot.slane %v1452, 1
  %v1454 = vmax.f32 %v1452, %v1453
  %v1455 = vsel %vm664, %v1397, -inf
  %v1456 = vsel %vm664, %v1398, -inf
  %v1457 = vmax.f32 %v1455, %v1456
  %v1458 = vrot.slane %v1457, 4
  %v1459 = vmax.f32 %v1457, %v1458
  %v1460 = vrot.slane %v1459, 2
  %v1461 = vmax.f32 %v1459, %v1460
  %v1462 = vrot.slane %v1461, 1
  %v1463 = vmax.f32 %v1461, %v1462
  %v1464 = vsel %vm664, %v1399, -inf
  %v1465 = vsel %vm664, %v1400, -inf
  %v1466 = vmax.f32 %v1464, %v1465
  %v1467 = vrot.slane %v1466, 4
  %v1468 = vmax.f32 %v1466, %v1467
  %v1469 = vrot.slane %v1468, 2
  %v1470 = vmax.f32 %v1468, %v1469
  %v1471 = vrot.slane %v1470, 1
  %v1472 = vmax.f32 %v1470, %v1471
  %v1473 = vld [vmem:[%s6] sm:$0xff]
  %v1474 = vld [vmem:[%s6 + $0x8] sm:$0xff]
  %v1475 = vld [vmem:[%s6 + $0x10] sm:$0xff]
  %v1476 = vld [vmem:[%s6 + $0x18] sm:$0xff]
  %v1477 = vld [vmem:[%s7] sm:$0x1]
  %v1479 = vlaneseq
  %v1480 = vshrl.u32 %v1479, 7
  %v1481 = vsub.s32 0, %v1480
  %v1482 = vrot.slane %v1477, %v1481
  %vm1492 = vcmask 1041409
  %v1493 = vsel %vm1492, %v1418, %v1409
  %vm1494 = vcmask 1042434
  %v1495 = vsel %vm1494, %v1427, %v1493
  %vm1496 = vcmask 1043459
  %v1497 = vsel %vm1496, %v1436, %v1495
  %vm1498 = vcmask 1044484
  %v1499 = vsel %vm1498, %v1445, %v1497
  %vm1500 = vcmask 1045509
  %v1501 = vsel %vm1500, %v1454, %v1499
  %vm1502 = vcmask 1046534
  %v1503 = vsel %vm1502, %v1463, %v1501
  %vm1504 = vcmask 1047559
  %v1505 = vsel %vm1504, %v1472, %v1503
  %v1506 = vsel %vm664, %v1505, 0
  %1508 = vmatprep.subr.mxu0 0.0
  %1509 = vmatpush1.msra.mxu0 %v1473
  %1510 = vmatprep.subr.mxu0 0.0
  %1511 = vmatpush1.msra.mxu0 %v1474
  %1512 = vmatprep.subr.mxu0 0.0
  %1513 = vmatpush1.msra.mxu0 %v1475
  %1514 = vmatprep.subr.mxu0 0.0
  %1515 = vmatpush1.msra.mxu0 %v1476
  %1516 = vmatprep.subr.mxu0 0.0
  %1517 = vmatpush1.msra.mxu0 0.0
  %1518 = vmatprep.subr.mxu0 0.0
  %1519 = vmatpush1.msra.mxu0 0.0
  %1520 = vmatprep.subr.mxu0 0.0
  %1521 = vmatpush1.msra.mxu0 0.0
  %1522 = vmatprep.subr.mxu0 0.0
  %1523 = vmatpush1.msra.mxu0 0.0
  %1524 = vmatprep.subr.mxu0 0.0
  %1525 = vmatpush1.msra.mxu0 0.0
  %1526 = vmatprep.subr.mxu0 0.0
  %1527 = vmatpush1.msra.mxu0 0.0
  %1528 = vmatprep.subr.mxu0 0.0
  %1529 = vmatpush1.msra.mxu0 0.0
  %1530 = vmatprep.subr.mxu0 0.0
  %1531 = vmatpush1.msra.mxu0 0.0
  %1532 = vmatprep.subr.mxu0 0.0
  %1533 = vmatpush1.msra.mxu0 0.0
  %1534 = vmatprep.subr.mxu0 0.0
  %1535 = vmatpush1.msra.mxu0 0.0
  %1536 = vmatprep.subr.mxu0 0.0
  %1537 = vmatpush1.msra.mxu0 0.0
  %1538 = vmatprep.subr.mxu0 0.0
  %1539 = vmatpush1.msra.mxu0 0.0
  %1540 = vmatprep.subr.mxu0 0.0
  %1541 = vmatpush1.msra.mxu0 0.0
  %1542 = vmatprep.subr.mxu0 0.0
  %1543 = vmatpush1.msra.mxu0 0.0
  %1544 = vmatprep.subr.mxu0 0.0
  %1545 = vmatpush1.msra.mxu0 0.0
  %1546 = vmatprep.subr.mxu0 0.0
  %1547 = vmatpush1.msra.mxu0 0.0
  %1548 = vmatprep.subr.mxu0 0.0
  %1549 = vmatpush1.msra.mxu0 0.0
  %1550 = vmatprep.subr.mxu0 0.0
  %1551 = vmatpush1.msra.mxu0 0.0
  %1552 = vmatprep.subr.mxu0 0.0
  %1553 = vmatpush1.msra.mxu0 0.0
  %1554 = vmatprep.subr.mxu0 0.0
  %1555 = vmatpush1.msra.mxu0 0.0
  %1556 = vmatprep.subr.mxu0 0.0
  %1557 = vmatpush1.msra.mxu0 0.0
  %1558 = vmatprep.subr.mxu0 0.0
  %1559 = vmatpush1.msra.mxu0 0.0
  %1560 = vmatprep.subr.mxu0 0.0
  %1561 = vmatpush1.msra.mxu0 0.0
  %1562 = vmatprep.subr.mxu0 0.0
  %1563 = vmatpush1.msra.mxu0 0.0
  %1564 = vmatprep.subr.mxu0 0.0
  %1565 = vmatpush1.msra.mxu0 0.0
  %1566 = vmatprep.subr.mxu0 0.0
  %1567 = vmatpush1.msra.mxu0 0.0
  %1568 = vmatprep.subr.mxu0 0.0
  %1569 = vmatpush1.msra.mxu0 0.0
  %1570 = vmatprep.subr.mxu0 0.0
  %1571 = vmatpush1.msra.mxu0 0.0
  %1572 = vmatprep.mubr.f32.mxu0 0.0
  %1573 = vmatmul.mubr.f32.gmra.mrb[0].mxu0 %v1506
  %v1574 = vpop.f32.mrb[0].mxu0
  %v1575 = vadd.f32 %v1482, %v1574
  %v1576 = vpop.f32.mrb[0].mxu0
  %1577 = vdwg.mxu0
  %v1578 = vmax.f32 %v1575, 0.0
  %vm1579 = vcmp.lt.s32.totalorder %v350, 4
  %vm1580 = vcmp.lt.s32.totalorder %v63, 8
  %vm1581 = vmxor %vm1579, %vm1580
  %vm1582 = vmxor %vm1581, 1
  %v1583 = vsel %vm1582, %v1578, 0.0
  %v1585 = vrot.slane %v1583, 4
  %v1587 = vadd.f32 %v1583, %v1585
  %v1588 = vld [vmem:[%s1] sm:$0xff]
  %1589 = vset.pattern.permute.xlu0 0
  %1590 = vperm.xlu0 %1589, %v1588
  %v1591 = vpop.permute.xlu0 %1590
  %vm1592 = vcmp.eq.s32.totalorder %v1591, %v63
  %v1593 = vsel %vm1592, 1.0, 0.0
  %v1594 = vld [vmem:[%s3] sm:$0xff]
  %v1595 = vld [vmem:[%s3 + $0x8] sm:$0xff]
  %v1596 = vld [vmem:[%s3 + $0x10] sm:$0x3f]
  %vm1597 = vcmask 179200
  %v1599 = vsel %vm1597, %v1593, 0
  %vm1601 = vcmask 1045504
  %v1603 = vsel %vm1601, %v1596, 0
  %1605 = vmatprep.subr.mxu0 0.0
  %1606 = vmatpush1.msra.mxu0 %v1594
  %1607 = vmatprep.subr.mxu0 0.0
  %1608 = vmatpush1.msra.mxu0 %v1595
  %1609 = vmatprep.subr.mxu0 0.0
  %1610 = vmatpush1.msra.mxu0 %v1603
  %1611 = vmatprep.subr.mxu0 0.0
  %1612 = vmatpush1.msra.mxu0 0.0
  %1613 = vmatprep.subr.mxu0 0.0
  %1614 = vmatpush1.msra.mxu0 0.0
  %1615 = vmatprep.subr.mxu0 0.0
  %1616 = vmatpush1.msra.mxu0 0.0
  %1617 = vmatprep.subr.mxu0 0.0
  %1618 = vmatpush1.msra.mxu0 0.0
  %1619 = vmatprep.subr.mxu0 0.0
  %1620 = vmatpush1.msra.mxu0 0.0
  %1621 = vmatprep.subr.mxu0 0.0
  %1622 = vmatpush1.msra.mxu0 0.0
  %1623 = vmatprep.subr.mxu0 0.0
  %1624 = vmatpush1.msra.mxu0 0.0
  %1625 = vmatprep.subr.mxu0 0.0
  %1626 = vmatpush1.msra.mxu0 0.0
  %1627 = vmatprep.subr.mxu0 0.0
  %1628 = vmatpush1.msra.mxu0 0.0
  %1629 = vmatprep.subr.mxu0 0.0
  %1630 = vmatpush1.msra.mxu0 0.0
  %1631 = vmatprep.subr.mxu0 0.0
  %1632 = vmatpush1.msra.mxu0 0.0
  %1633 = vmatprep.subr.mxu0 0.0
  %1634 = vmatpush1.msra.mxu0 0.0
  %1635 = vmatprep.subr.mxu0 0.0
  %1636 = vmatpush1.msra.mxu0 0.0
  %1637 = vmatprep.subr.mxu0 0.0
  %1638 = vmatpush1.msra.mxu0 0.0
  %1639 = vmatprep.subr.mxu0 0.0
  %1640 = vmatpush1.msra.mxu0 0.0
  %1641 = vmatprep.subr.mxu0 0.0
  %1642 = vmatpush1.msra.mxu0 0.0
  %1643 = vmatprep.subr.mxu0 0.0
  %1644 = vmatpush1.msra.mxu0 0.0
  %1645 = vmatprep.subr.mxu0 0.0
  %1646 = vmatpush1.msra.mxu0 0.0
  %1647 = vmatprep.subr.mxu0 0.0
  %1648 = vmatpush1.msra.mxu0 0.0
  %1649 = vmatprep.subr.mxu0 0.0
  %1650 = vmatpush1.msra.mxu0 0.0
  %1651 = vmatprep.subr.mxu0 0.0
  %1652 = vmatpush1.msra.mxu0 0.0
  %1653 = vmatprep.subr.mxu0 0.0
  %1654 = vmatpush1.msra.mxu0 0.0
  %1655 = vmatprep.subr.mxu0 0.0
  %1656 = vmatpush1.msra.mxu0 0.0
  %1657 = vmatprep.subr.mxu0 0.0
  %1658 = vmatpush1.msra.mxu0 0.0
  %1659 = vmatprep.subr.mxu0 0.0
  %1660 = vmatpush1.msra.mxu0 0.0
  %1661 = vmatprep.subr.mxu0 0.0
  %1662 = vmatpush1.msra.mxu0 0.0
  %1663 = vmatprep.subr.mxu0 0.0
  %1664 = vmatpush1.msra.mxu0 0.0
  %1665 = vmatprep.subr.mxu0 0.0
  %1666 = vmatpush1.msra.mxu0 0.0
  %1667 = vmatprep.subr.mxu0 0.0
  %1668 = vmatpush1.msra.mxu0 0.0
  %1669 = vmatprep.mubr.f32.mxu0 0.0
  %1670 = vmatmul.mubr.f32.gmra.mrb[0].mxu0 %v1599
  %v1671 = vpop.f32.mrb[0].mxu0
  %v1672 = vadd.f32 0.0, %v1671
  %v1673 = vpop.f32.mrb[0].mxu0
  %1674 = vdwg.mxu0
  %v1676 = vrot.slane %v1672, 4
  %v1678 = vadd.f32 %v1672, %v1676
  %v1679 = vld [vmem:[%s8] sm:$0xff]
  %v1680 = vld [vmem:[%s8 + $0x8] sm:$0xff]
  %v1681 = vld [vmem:[%s9] sm:$0xff]
  %v1682 = vld [vmem:[%s9 + $0x8] sm:$0xff]
  %vm1683 = vcmask 130048
  %v1685 = vsel %vm1683, %v1678, 0
  %1687 = vmatprep.subr.mxu0 0.0
  %1688 = vmatpush1.msra.mxu0 %v1681
  %1689 = vmatprep.subr.mxu0 0.0
  %1690 = vmatpush1.msra.mxu0 %v1682
  %1691 = vmatprep.subr.mxu0 0.0
  %1692 = vmatpush1.msra.mxu0 0.0
  %1693 = vmatprep.subr.mxu0 0.0
  %1694 = vmatpush1.msra.mxu0 0.0
  %1695 = vmatprep.subr.mxu0 0.0
  %1696 = vmatpush1.msra.mxu0 0.0
  %1697 = vmatprep.subr.mxu0 0.0
  %1698 = vmatpush1.msra.mxu0 0.0
  %1699 = vmatprep.subr.mxu0 0.0
  %1700 = vmatpush1.msra.mxu0 0.0
  %1701 = vmatprep.subr.mxu0 0.0
  %1702 = vmatpush1.msra.mxu0 0.0
  %1703 = vmatprep.subr.mxu0 0.0
  %1704 = vmatpush1.msra.mxu0 0.0
  %1705 = vmatprep.subr.mxu0 0.0
  %1706 = vmatpush1.msra.mxu0 0.0
  %1707 = vmatprep.subr.mxu0 0.0
  %1708 = vmatpush1.msra.mxu0 0.0
  %1709 = vmatprep.subr.mxu0 0.0
  %1710 = vmatpush1.msra.mxu0 0.0
  %1711 = vmatprep.subr.mxu0 0.0
  %1712 = vmatpush1.msra.mxu0 0.0
  %1713 = vmatprep.subr.mxu0 0.0
  %1714 = vmatpush1.msra.mxu0 0.0
  %1715 = vmatprep.subr.mxu0 0.0
  %1716 = vmatpush1.msra.mxu0 0.0
  %1717 = vmatprep.subr.mxu0 0.0
  %1718 = vmatpush1.msra.mxu0 0.0
  %1719 = vmatprep.subr.mxu0 0.0
  %1720 = vmatpush1.msra.mxu0 0.0
  %1721 = vmatprep.subr.mxu0 0.0
  %1722 = vmatpush1.msra.mxu0 0.0
  %1723 = vmatprep.subr.mxu0 0.0
  %1724 = vmatpush1.msra.mxu0 0.0
  %1725 = vmatprep.subr.mxu0 0.0
  %1726 = vmatpush1.msra.mxu0 0.0
  %1727 = vmatprep.subr.mxu0 0.0
  %1728 = vmatpush1.msra.mxu0 0.0
  %1729 = vmatprep.subr.mxu0 0.0
  %1730 = vmatpush1.msra.mxu0 0.0
  %1731 = vmatprep.subr.mxu0 0.0
  %1732 = vmatpush1.msra.mxu0 0.0
  %1733 = vmatprep.subr.mxu0 0.0
  %1734 = vmatpush1.msra.mxu0 0.0
  %1735 = vmatprep.subr.mxu0 0.0
  %1736 = vmatpush1.msra.mxu0 0.0
  %1737 = vmatprep.subr.mxu0 0.0
  %1738 = vmatpush1.msra.mxu0 0.0
  %1739 = vmatprep.subr.mxu0 0.0
  %1740 = vmatpush1.msra.mxu0 0.0
  %1741 = vmatprep.subr.mxu0 0.0
  %1742 = vmatpush1.msra.mxu0 0.0
  %1743 = vmatprep.subr.mxu0 0.0
  %1744 = vmatpush1.msra.mxu0 0.0
  %1745 = vmatprep.subr.mxu0 0.0
  %1746 = vmatpush1.msra.mxu0 0.0
  %1747 = vmatprep.subr.mxu0 0.0
  %1748 = vmatpush1.msra.mxu0 0.0
  %1749 = vmatprep.subr.mxu0 0.0
  %1750 = vmatpush1.msra.mxu0 0.0
  %1751 = vmatprep.mubr.f32.mxu0 0.0
  %1752 = vmatmul.mubr.f32.gmra.mrb[0].mxu0 %v1685
  %v1753 = vpop.f32.mrb[0].mxu0
  %v1754 = vadd.f32 0.0, %v1753
  %v1755 = vpop.f32.mrb[0].mxu0
  %1756 = vdwg.mxu0
  %v1758 = vsel %vm1683, %v1587, 0
  %1760 = vmatprep.subr.mxu0 0.0
  %1761 = vmatpush1.msra.mxu0 %v1679
  %1762 = vmatprep.subr.mxu0 0.0
  %1763 = vmatpush1.msra.mxu0 %v1680
  %1764 = vmatprep.subr.mxu0 0.0
  %1765 = vmatpush1.msra.mxu0 0.0
  %1766 = vmatprep.subr.mxu0 0.0
  %1767 = vmatpush1.msra.mxu0 0.0
  %1768 = vmatprep.subr.mxu0 0.0
  %1769 = vmatpush1.msra.mxu0 0.0
  %1770 = vmatprep.subr.mxu0 0.0
  %1771 = vmatpush1.msra.mxu0 0.0
  %1772 = vmatprep.subr.mxu0 0.0
  %1773 = vmatpush1.msra.mxu0 0.0
  %1774 = vmatprep.subr.mxu0 0.0
  %1775 = vmatpush1.msra.mxu0 0.0
  %1776 = vmatprep.subr.mxu0 0.0
  %1777 = vmatpush1.msra.mxu0 0.0
  %1778 = vmatprep.subr.mxu0 0.0
  %1779 = vmatpush1.msra.mxu0 0.0
  %1780 = vmatprep.subr.mxu0 0.0
  %1781 = vmatpush1.msra.mxu0 0.0
  %1782 = vmatprep.subr.mxu0 0.0
  %1783 = vmatpush1.msra.mxu0 0.0
  %1784 = vmatprep.subr.mxu0 0.0
  %1785 = vmatpush1.msra.mxu0 0.0
  %1786 = vmatprep.subr.mxu0 0.0
  %1787 = vmatpush1.msra.mxu0 0.0
  %1788 = vmatprep.subr.mxu0 0.0
  %1789 = vmatpush1.msra.mxu0 0.0
  %1790 = vmatprep.subr.mxu0 0.0
  %1791 = vmatpush1.msra.mxu0 0.0
  %1792 = vmatprep.subr.mxu0 0.0
  %1793 = vmatpush1.msra.mxu0 0.0
  %1794 = vmatprep.subr.mxu0 0.0
  %1795 = vmatpush1.msra.mxu0 0.0
  %1796 = vmatprep.subr.mxu0 0.0
  %1797 = vmatpush1.msra.mxu0 0.0
  %1798 = vmatprep.subr.mxu0 0.0
  %1799 = vmatpush1.msra.mxu0 0.0
  %1800 = vmatprep.subr.mxu0 0.0
  %1801 = vmatpush1.msra.mxu0 0.0
  %1802 = vmatprep.subr.mxu0 0.0
  %1803 = vmatpush1.msra.mxu0 0.0
  %1804 = vmatprep.subr.mxu0 0.0
  %1805 = vmatpush1.msra.mxu0 0.0
  %1806 = vmatprep.subr.mxu0 0.0
  %1807 = vmatpush1.msra.mxu0 0.0
  %1808 = vmatprep.subr.mxu0 0.0
  %1809 = vmatpush1.msra.mxu0 0.0
  %1810 = vmatprep.subr.mxu0 0.0
  %1811 = vmatpush1.msra.mxu0 0.0
  %1812 = vmatprep.subr.mxu0 0.0
  %1813 = vmatpush1.msra.mxu0 0.0
  %1814 = vmatprep.subr.mxu0 0.0
  %1815 = vmatpush1.msra.mxu0 0.0
  %1816 = vmatprep.subr.mxu0 0.0
  %1817 = vmatpush1.msra.mxu0 0.0
  %1818 = vmatprep.subr.mxu0 0.0
  %1819 = vmatpush1.msra.mxu0 0.0
  %1820 = vmatprep.subr.mxu0 0.0
  %1821 = vmatpush1.msra.mxu0 0.0
  %1822 = vmatprep.subr.mxu0 0.0
  %1823 = vmatpush1.msra.mxu0 0.0
  %1824 = vmatprep.mubr.f32.mxu0 0.0
  %1825 = vmatmul.mubr.f32.gmra.mrb[0].mxu0 %v1758
  %v1826 = vpop.f32.mrb[0].mxu0
  %v1827 = vadd.f32 %v1754, %v1826
  %v1828 = vpop.f32.mrb[0].mxu0
  %1829 = vdwg.mxu0
  %v1830 = vld [vmem:[#allocation2] sm:$0x1]
  %v1832 = vlaneseq
  %v1833 = vshrl.u32 %v1832, 7
  %v1834 = vsub.s32 0, %v1833
  %v1835 = vrot.slane %v1830, %v1834
  %1836 = vrot.lane.b32.xlu0 %v1835, 10
  %v1837 = vpop.permute.xlu0 %1836
  %v1839 = vadd.f32 %v1827, %v1837
  %v1840 = vmul.f32 %v1827, %v1827
  %v1841 = vmul.f32 %v1587, %v1587
  %v1842 = vld [vmem:[%s10] sm:$0xff]
  %v1843 = vld [vmem:[%s10 + $0x8] sm:$0xff]
  %v1844 = vmul.f32 %v1678, %v1678
  %v1845 = vld [vmem:[%s11] sm:$0xff]
  %v1846 = vld [vmem:[%s11 + $0x8] sm:$0xff]
  %v1848 = vsel %vm1683, %v1844, 0
  %1850 = vmatprep.subr.mxu0 0.0
  %1851 = vmatpush1.msra.mxu0 %v1845
  %1852 = vmatprep.subr.mxu0 0.0
  %1853 = vmatpush1.msra.mxu0 %v1846
  %1854 = vmatprep.subr.mxu0 0.0
  %1855 = vmatpush1.msra.mxu0 0.0
  %1856 = vmatprep.subr.mxu0 0.0
  %1857 = vmatpush1.msra.mxu0 0.0
  %1858 = vmatprep.subr.mxu0 0.0
  %1859 = vmatpush1.msra.mxu0 0.0
  %1860 = vmatprep.subr.mxu0 0.0
  %1861 = vmatpush1.msra.mxu0 0.0
  %1862 = vmatprep.subr.mxu0 0.0
  %1863 = vmatpush1.msra.mxu0 0.0
  %1864 = vmatprep.subr.mxu0 0.0
  %1865 = vmatpush1.msra.mxu0 0.0
  %1866 = vmatprep.subr.mxu0 0.0
  %1867 = vmatpush1.msra.mxu0 0.0
  %1868 = vmatprep.subr.mxu0 0.0
  %1869 = vmatpush1.msra.mxu0 0.0
  %1870 = vmatprep.subr.mxu0 0.0
  %1871 = vmatpush1.msra.mxu0 0.0
  %1872 = vmatprep.subr.mxu0 0.0
  %1873 = vmatpush1.msra.mxu0 0.0
  %1874 = vmatprep.subr.mxu0 0.0
  %1875 = vmatpush1.msra.mxu0 0.0
  %1876 = vmatprep.subr.mxu0 0.0
  %1877 = vmatpush1.msra.mxu0 0.0
  %1878 = vmatprep.subr.mxu0 0.0
  %1879 = vmatpush1.msra.mxu0 0.0
  %1880 = vmatprep.subr.mxu0 0.0
  %1881 = vmatpush1.msra.mxu0 0.0
  %1882 = vmatprep.subr.mxu0 0.0
  %1883 = vmatpush1.msra.mxu0 0.0
  %1884 = vmatprep.subr.mxu0 0.0
  %1885 = vmatpush1.msra.mxu0 0.0
  %1886 = vmatprep.subr.mxu0 0.0
  %1887 = vmatpush1.msra.mxu0 0.0
  %1888 = vmatprep.subr.mxu0 0.0
  %1889 = vmatpush1.msra.mxu0 0.0
  %1890 = vmatprep.subr.mxu0 0.0
  %1891 = vmatpush1.msra.mxu0 0.0
  %1892 = vmatprep.subr.mxu0 0.0
  %1893 = vmatpush1.msra.mxu0 0.0
  %1894 = vmatprep.subr.mxu0 0.0
  %1895 = vmatpush1.msra.mxu0 0.0
  %1896 = vmatprep.subr.mxu0 0.0
  %1897 = vmatpush1.msra.mxu0 0.0
  %1898 = vmatprep.subr.mxu0 0.0
  %1899 = vmatpush1.msra.mxu0 0.0
  %1900 = vmatprep.subr.mxu0 0.0
  %1901 = vmatpush1.msra.mxu0 0.0
  %1902 = vmatprep.subr.mxu0 0.0
  %1903 = vmatpush1.msra.mxu0 0.0
  %1904 = vmatprep.subr.mxu0 0.0
  %1905 = vmatpush1.msra.mxu0 0.0
  %1906 = vmatprep.subr.mxu0 0.0
  %1907 = vmatpush1.msra.mxu0 0.0
  %1908 = vmatprep.subr.mxu0 0.0
  %1909 = vmatpush1.msra.mxu0 0.0
  %1910 = vmatprep.subr.mxu0 0.0
  %1911 = vmatpush1.msra.mxu0 0.0
  %1912 = vmatprep.subr.mxu0 0.0
  %1913 = vmatpush1.msra.mxu0 0.0
  %1914 = vmatprep.mubr.f32.mxu0 0.0
  %1915 = vmatmul.mubr.f32.gmra.mrb[0].mxu0 %v1848
  %v1916 = vpop.f32.mrb[0].mxu0
  %v1917 = vadd.f32 0.0, %v1916
  %v1918 = vpop.f32.mrb[0].mxu0
  %1919 = vdwg.mxu0
  %v1921 = vsel %vm1683, %v1841, 0
  %1923 = vmatprep.subr.mxu0 0.0
  %1924 = vmatpush1.msra.mxu0 %v1842
  %1925 = vmatprep.subr.mxu0 0.0
  %1926 = vmatpush1.msra.mxu0 %v1843
  %1927 = vmatprep.subr.mxu0 0.0
  %1928 = vmatpush1.msra.mxu0 0.0
  %1929 = vmatprep.subr.mxu0 0.0
  %1930 = vmatpush1.msra.mxu0 0.0
  %1931 = vmatprep.subr.mxu0 0.0
  %1932 = vmatpush1.msra.mxu0 0.0
  %1933 = vmatprep.subr.mxu0 0.0
  %1934 = vmatpush1.msra.mxu0 0.0
  %1935 = vmatprep.subr.mxu0 0.0
  %1936 = vmatpush1.msra.mxu0 0.0
  %1937 = vmatprep.subr.mxu0 0.0
  %1938 = vmatpush1.msra.mxu0 0.0
  %1939 = vmatprep.subr.mxu0 0.0
  %1940 = vmatpush1.msra.mxu0 0.0
  %1941 = vmatprep.subr.mxu0 0.0
  %1942 = vmatpush1.msra.mxu0 0.0
  %1943 = vmatprep.subr.mxu0 0.0
  %1944 = vmatpush1.msra.mxu0 0.0
  %1945 = vmatprep.subr.mxu0 0.0
  %1946 = vmatpush1.msra.mxu0 0.0
  %1947 = vmatprep.subr.mxu0 0.0
  %1948 = vmatpush1.msra.mxu0 0.0
  %1949 = vmatprep.subr.mxu0 0.0
  %1950 = vmatpush1.msra.mxu0 0.0
  %1951 = vmatprep.subr.mxu0 0.0
  %1952 = vmatpush1.msra.mxu0 0.0
  %1953 = vmatprep.subr.mxu0 0.0
  %1954 = vmatpush1.msra.mxu0 0.0
  %1955 = vmatprep.subr.mxu0 0.0
  %1956 = vmatpush1.msra.mxu0 0.0
  %1957 = vmatprep.subr.mxu0 0.0
  %1958 = vmatpush1.msra.mxu0 0.0
  %1959 = vmatprep.subr.mxu0 0.0
  %1960 = vmatpush1.msra.mxu0 0.0
  %1961 = vmatprep.subr.mxu0 0.0
  %1962 = vmatpush1.msra.mxu0 0.0
  %1963 = vmatprep.subr.mxu0 0.0
  %1964 = vmatpush1.msra.mxu0 0.0
  %1965 = vmatprep.subr.mxu0 0.0
  %1966 = vmatpush1.msra.mxu0 0.0
  %1967 = vmatprep.subr.mxu0 0.0
  %1968 = vmatpush1.msra.mxu0 0.0
  %1969 = vmatprep.subr.mxu0 0.0
  %1970 = vmatpush1.msra.mxu0 0.0
  %1971 = vmatprep.subr.mxu0 0.0
  %1972 = vmatpush1.msra.mxu0 0.0
  %1973 = vmatprep.subr.mxu0 0.0
  %1974 = vmatpush1.msra.mxu0 0.0
  %1975 = vmatprep.subr.mxu0 0.0
  %1976 = vmatpush1.msra.mxu0 0.0
  %1977 = vmatprep.subr.mxu0 0.0
  %1978 = vmatpush1.msra.mxu0 0.0
  %1979 = vmatprep.subr.mxu0 0.0
  %1980 = vmatpush1.msra.mxu0 0.0
  %1981 = vmatprep.subr.mxu0 0.0
  %1982 = vmatpush1.msra.mxu0 0.0
  %1983 = vmatprep.subr.mxu0 0.0
  %1984 = vmatpush1.msra.mxu0 0.0
  %1985 = vmatprep.subr.mxu0 0.0
  %1986 = vmatpush1.msra.mxu0 0.0
  %1987 = vmatprep.mubr.f32.mxu0 0.0
  %1988 = vmatmul.mubr.f32.gmra.mrb[0].mxu0 %v1921
  %v1989 = vpop.f32.mrb[0].mxu0
  %v1990 = vadd.f32 %v1917, %v1989
  %v1991 = vpop.f32.mrb[0].mxu0
  %1992 = vdwg.mxu0
  %v1993 = vsub.f32 %v1840, %v1990
  %vm1994 = vcmask 76800
  %v1995 = vsel %vm1994, %v1993, 0.0
  %1996 = vadd.xlane.f32.xlu0 %v1995
  %v1997 = vpop.xlane.xlu0 %1996
  %v1998 = vmul.f32 %v1997, 0.5
  %v1999 = vadd.f32 %v1839, %v1998
  %2001 = vrot.lane.b32.xlu0 %v1999, 118
  %v2002 = vpop.permute.xlu0 %2001
  %vm2004 = vcmask 3072
  %2005 = vst.msk [vmem:[%s13] sm:$0xf] %vm2004, %v2002
  // Predicated region
  $region54: #{deepconn_forward.1} parent=0 // pred_check
    _
  $region55: #{deepconn_forward.1} parent=0 // pred_check_branch
    %2007 = sbr.rel (0) target = $region57
  $region56: #{deepconn_forward.1} parent=0 // pred_region
    _
  $region57: #{deepconn_forward.1} parent=0 // pred_fallthru
    _
  // Predicated region
  $region58: #{deepconn_forward.1} parent=0 // pred_check
    _
  $region59: #{deepconn_forward.1} parent=0 // pred_check_branch
    %2009 = sbr.rel (0) target = $region61
  $region60: #{deepconn_forward.1} parent=0 // pred_region
    _
  $region61: #{deepconn_forward.1} parent=0 // pred_fallthru
    _

</llo_original>
